<compile_context>
chip_gen: v5e
topology: v5e:2x2
jax: 0.10.0
libtpu: 0.0.40
codegen_flags: <defaults>
</compile_context>

<pallas_src>
import functools
import math

import numpy as np
import jax
import jax.numpy as jnp
from jax.experimental import pallas as pl
from jax.experimental.pallas import tpu as pltpu


# ----------------------------------------------------------------------------
# In-kernel exact GELU (erf-based, matching torch nn.GELU() default).
# TODO(synk): Abramowitz&Stegun 7.1.26 erf (max abs err ~1.5e-7) instead of lax.erf; all
#             math stays in f32 (v5e VPU/EUP have no bf16).
# ----------------------------------------------------------------------------
def _erf_f32(z):
    a1, a2, a3, a4, a5 = 0.254829592, -0.284496736, 1.421413741, -1.453152027, 1.061405429
    p = 0.3275911
    az = jnp.abs(z)
    t = pl.reciprocal(1.0 + p * az, approx=True)   # EUP slot; error << erf poly error
    poly = ((((a5 * t + a4) * t + a3) * t + a2) * t + a1) * t
    y = 1.0 - poly * jnp.exp(-az * az)
    return jnp.where(z >= 0.0, y, -y)


def _gelu_exact(x):
    return 0.5 * x * (1.0 + _erf_f32(x * (1.0 / math.sqrt(2.0))))


def _row_shift(x, s):
    """result[q] = x[(q + s) mod rows].  Wrapped junk only lands in halo rows/columns of the
    padded period grid, which are masked (conv1) or never extracted (conv2 output)."""
    if s == 0:
        return x
    return jnp.concatenate([x[s:], x[:s]], axis=0)


# ----------------------------------------------------------------------------
# Fused per-period kernel:
#   conv1 (merged inception via im2col, d_model -> d_ff tile) -> GELU -> halo mask ->
#   conv2 partial (d_ff tile -> d_model) accumulated over d_ff tiles -> padded-slab store.
# ----------------------------------------------------------------------------
def _times_branch_kernel(xcol_ref, w1_ref, b1_ref, w2_ref, b2_ref, out_ref, acc2_ref,
                         *, H, W, Wp, pad, ksize, fold_n):
    c = pl.program_id(1)                      # d_ff tile index (reduction, "arbitrary")
    taps = ksize * ksize
    Bb, M, _ = xcol_ref.shape
    Cout = out_ref.shape[2]

    @pl.when(c == 0)
    def _init():
        acc2_ref[...] = jnp.zeros_like(acc2_ref)

    # Interior mask of the padded period grid, built in-kernel from an iota (no mask DMA).
    # Flat row r maps to (iy, ix) = divmod(r, Wp); float division avoids vector int div.
    r = jax.lax.broadcasted_iota(jnp.int32, (M, 1), 0).astype(jnp.float32)
    iy = jnp.floor((r + 0.5) * (1.0 / Wp))
    ix = r - iy * Wp
    interior = ((iy >= pad) & (iy < pad + H) & (ix >= pad) & (ix < pad + W))
    maskf = interior.astype(jnp.float32)                      # (M, 1)

    # Static unroll over the batch block: weight tiles stay VMEM-resident across it.
    for bi in range(Bb):
        x = xcol_ref[bi]                                      # (M, KK*Cin) bf16
        # conv1 (merged inception, this d_ff tile): ONE matmul, contraction = KK*Cin.
        a1 = jnp.dot(x, w1_ref[...], preferred_element_type=jnp.float32)
        # bias + exact GELU in f32, then zero the halo so conv2 sees true zero padding.
        mid = (_gelu_exact(a1 + b1_ref[...]) * maskf).astype(x.dtype)

        # conv2 partial for this d_ff tile: shift only the narrow (M, Cout) tap products.
        z = jnp.zeros((M, Cout), jnp.float32)
        if fold_n:
            # Taps folded into the MXU N dim: one big dot, then 128-aligned column slices.
            zall = jnp.dot(mid, w2_ref[...], preferred_element_type=jnp.float32)
            for t in range(taps):
                dy, dx = divmod(t, ksize)
                s = (dy - pad) * Wp + (dx - pad)
                z = z + _row_shift(zall[:, t * Cout:(t + 1) * Cout], s)
        else:
            for t in range(taps):
                dy, dx = divmod(t, ksize)
                s = (dy - pad) * Wp + (dx - pad)
                z = z + _row_shift(jnp.dot(mid, w2_ref[t],
                                           preferred_element_type=jnp.float32), s)
        acc2_ref[bi] = acc2_ref[bi] + z

    # Finalize: one aligned (Bb, M, Cout) store of the padded slab; crop / softmax weight /
    # residual happen as fused XLA ops in the wrapper (no per-row unaligned slices here).
    @pl.when(c == pl.num_programs(1) - 1)
    def _finalize():
        out_ref[...] = (acc2_ref[...] + b2_ref[...]).astype(out_ref.dtype)


# ----------------------------------------------------------------------------
# VMEM-aware planning (generation-gated per the review).
# ----------------------------------------------------------------------------
def _vmem_capacity_bytes():
    try:
        return int(pltpu.get_tpu_info().vmem_capacity_bytes)
    except Exception:
        return 64 * 1024 * 1024          # conservative (v7x per-core) fallback


def _divisors_desc(n):
    return [d for d in range(n, 0, -1) if n % d == 0]


def _plan_tiles(B, M, cin_col, cff, cout, kk, vmem_cap):
    """Pick (batch_block, d_ff_tile).  Models double-buffered input/weights/output blocks,
    the f32 conv2 accumulator scratch and the in-kernel f32 a1 / bf16 mid temporaries.
    On <=64 MiB/core parts (v7x) keep >=2 batch blocks to feed both TensorCores via the
    'parallel' axis; on 128 MiB parts (v5e/v6e) fold the batch fully for weight reuse."""
    budget = max(int(min(vmem_cap - 8 * 2**20, 112 * 2**20) * 0.6), 8 * 2**20)
    per_col_w = 2 * (cin_col + kk * cout) * 2              # w1 + w2 cols, bf16, double-buffered
    per_col_act = M * (4 + 2)                              # a1 (f32) + mid (bf16) per column
    per_b_fixed = 2 * M * cin_col * 2 + 2 * M * cout * 4 + M * cout * 4   # xcol/out (x2) + acc2
    ref_cols = 128 if cff % 128 == 0 else cff
    per_b = per_b_fixed + ref_cols * per_col_act
    bb = 1
    for d in _divisors_desc(B):
        if d <= 8 and d * per_b + ref_cols * per_col_w <= budget:   # cap unroll at 8
            bb = d
            break
    if vmem_cap <= 64 * 2**20 and B >= 2:                  # v7x-like: keep 2 parallel blocks
        while B // bb < 2 and bb > 1:
            bb = max(d for d in _divisors_desc(B) if d < bb)
    if cff % 128 != 0:
        return bb, cff                                     # small / demo d_ff: single tile
    per_col = per_col_w + per_col_act
    avail = max(budget - bb * per_b_fixed, 0)
    tile = max(128, min(cff, (avail // per_col) // 128 * 128))
    while cff % tile:
        tile -= 128
    return bb, tile


def _times_branch(xcol, w1, b1, w2, b2, *, H, W, pad, ksize, bb, cff_tile, fold_n, vmem_cap):
    B, M, Ccol = xcol.shape
    Cff = w1.shape[1]
    Cout = b2.shape[1]
    KK = ksize * ksize
    nct = Cff // cff_tile
    nb = B // bb
    Wp = W + 2 * pad
    kern = functools.partial(_times_branch_kernel, H=H, W=W, Wp=Wp, pad=pad,
                             ksize=ksize, fold_n=fold_n)
    if fold_n:
        w2_spec = pl.BlockSpec((cff_tile, KK * Cout), lambda b, c: (c, 0))
    else:
        w2_spec = pl.BlockSpec((KK, cff_tile, Cout), lambda b, c: (0, c, 0))
    vmem_limit = int(max(32 * 2**20, min(vmem_cap - 16 * 2**20, 110 * 2**20)))
    return pl.pallas_call(
        kern,
        out_shape=jax.ShapeDtypeStruct((B, M, Cout), jnp.float32),
        grid_spec=pltpu.PrefetchScalarGridSpec(
            num_scalar_prefetch=0,
            grid=(nb, nct),
            in_specs=[
                pl.BlockSpec((bb, M, Ccol), lambda b, c: (b, 0, 0)),      # im2col slab
                pl.BlockSpec((Ccol, cff_tile), lambda b, c: (0, c)),      # w1 tile
                pl.BlockSpec((1, cff_tile), lambda b, c: (0, c)),         # b1 tile
                w2_spec,                                                  # w2 tile
                pl.BlockSpec((1, Cout), lambda b, c: (0, 0)),             # b2
            ],
            out_specs=pl.BlockSpec((bb, M, Cout), lambda b, c: (b, 0, 0)),
            scratch_shapes=[pltpu.VMEM((bb, M, Cout), jnp.float32)],      # conv2 accumulator
        ),
        compiler_params=pltpu.CompilerParams(
            dimension_semantics=("parallel", "arbitrary"),
            vmem_limit_bytes=vmem_limit,
        ),
    )(xcol, w1, b1, w2, b2)


# ----------------------------------------------------------------------------
# Deterministic params mirroring Inception_Block_V1 init: kaiming_normal_ (fan_out, relu)
# per branch, bias 0; branches zero-embedded into the largest kernel and averaged (exact
# equivalence to the mean-of-convs since the block is linear in the weights).
# ----------------------------------------------------------------------------
def _make_inception_params(key, cin, cout, num_kernels):
    kmax = 2 * num_kernels - 1
    w_eq = jnp.zeros((kmax, kmax, cin, cout), jnp.float32)
    for i in range(num_kernels):
        ks = 2 * i + 1
        fan_out = cout * ks * ks
        std = math.sqrt(2.0 / fan_out)
        key, sub = jax.random.split(key)
        w = jax.random.normal(sub, (ks, ks, cin, cout), jnp.float32) * std
        off = (kmax - ks) // 2
        w_eq = w_eq.at[off:off + ks, off:off + ks, :, :].add(w / num_kernels)
    b_eq = jnp.zeros((cout,), jnp.float32)      # per-branch biases are 0 -> mean is 0
    return w_eq.reshape(kmax * kmax, cin, cout), b_eq


# ----------------------------------------------------------------------------
# FFT_for_Period: plain JAX (data-dependent period selection -> static shapes).
# ----------------------------------------------------------------------------
def fft_for_period(x, k=2):
    xf = jnp.fft.rfft(x, axis=1)
    amp = jnp.abs(xf)                                   # [B, F, N]
    frequency_list = amp.mean(axis=0).mean(axis=-1)     # [F]
    frequency_list = frequency_list.at[0].set(0.0)
    top = jax.lax.top_k(frequency_list, k)[1]
    # TODO(synk): this host round trip is required because the chosen periods set static
    #             reshape/conv shapes; in training, pass cached `periods` to __call__ so the
    #             k Pallas calls dispatch without a per-step device->host sync.
    top = np.asarray(jax.device_get(top))
    period = x.shape[1] // np.maximum(top, 1)           # guard degenerate all-zero spectra
    return period, amp.mean(axis=-1)[:, top]            # (periods, [B, k] weights)


# ----------------------------------------------------------------------------
# TimesBlock
# ----------------------------------------------------------------------------
class TimesBlockPallas:
    def __init__(self, seq_len, pred_len, d_model, d_ff, num_kernels, top_k, key,
                 mxu_dtype=jnp.bfloat16):
        self.seq_len = seq_len
        self.pred_len = pred_len
        self.k = top_k
        self.d_model = d_model
        self.d_ff = d_ff
        self.ksize = 2 * num_kernels - 1
        self.pad = num_kernels - 1
        self.mxu_dtype = mxu_dtype
        KK = self.ksize * self.ksize
        k1, k2 = jax.random.split(key)
        w1, b1 = _make_inception_params(k1, d_model, d_ff, num_kernels)    # (KK, Cin, Cff)
        w2, b2 = _make_inception_params(k2, d_ff, d_model, num_kernels)    # (KK, Cff, Cout)
        # conv1 weights flattened for the im2col contraction (tap-major, matching the slab).
        self.w1_flat = w1.reshape(KK * d_model, d_ff).astype(mxu_dtype)
        # conv2 weights: fold taps into the matmul N dim only when Cout is lane-aligned.
        self.fold_n = (d_model % 128 == 0)
        if self.fold_n:
            self.w2_mat = w2.transpose(1, 0, 2).reshape(d_ff, KK * d_model).astype(mxu_dtype)
        else:
            self.w2_mat = w2.astype(mxu_dtype)                             # (KK, Cff, Cout)
        self.b1 = b1.reshape(1, -1)
        self.b2 = b2.reshape(1, -1)
        self.vmem_cap = _vmem_capacity_bytes()

    def __call__(self, x, periods=None, period_weight=None):
        B, T, N = x.shape
        if periods is None:
            periods, period_weight = fft_for_period(x, self.k)
        pw = jax.nn.softmax(period_weight, axis=1).astype(jnp.float32)     # (B, k)
        pad, ksize = self.pad, self.ksize
        KK = ksize * ksize

        # Residual + softmax-weighted sum of branches (cheap fused XLA elementwise ops).
        acc = x.astype(jnp.float32)
        for i in range(self.k):
            period = max(int(periods[i]), 1)
            length = T if T % period == 0 else (T // period + 1) * period
            xt = x if length == T else jnp.concatenate(
                [x, jnp.zeros((B, length - T, N), x.dtype)], axis=1)
            H, W = length // period, period
            Hp, Wp = H + 2 * pad, W + 2 * pad
            M = Hp * Wp
            # im2col slab on the double-zero-padded grid (true zeros everywhere, tap-major
            # channel order matching w1_flat); bf16 for the MXU / halved DMA bytes.
            img2 = jnp.pad(xt.reshape(B, H, W, N),
                           ((0, 0), (2 * pad, 2 * pad), (2 * pad, 2 * pad), (0, 0)))
            cols = [img2[:, dy:dy + Hp, dx:dx + Wp, :]
                    for dy in range(ksize) for dx in range(ksize)]
            xcol = jnp.concatenate(cols, axis=-1).reshape(B, M, KK * N).astype(self.mxu_dtype)

            bb, cff_tile = _plan_tiles(B, M, KK * N, self.d_ff, N, KK, self.vmem_cap)
            out = _times_branch(xcol, self.w1_flat, self.b1, self.w2_mat, self.b2,
                                H=H, W=W, pad=pad, ksize=ksize, bb=bb,
                                cff_tile=cff_tile, fold_n=self.fold_n,
                                vmem_cap=self.vmem_cap)                    # (B, M, N) f32
            # Aligned wrapper-side crop of the padded slab, then fused weight + residual.
            y = out.reshape(B, Hp, Wp, N)[:, pad:pad + H, pad:pad + W, :]
            y = y.reshape(B, H * W, N)[:, :T, :]
            acc = acc + pw[:, i][:, None, None] * y
        return acc.astype(x.dtype)


if __name__ == "__main__":
    key = jax.random.PRNGKey(0)
    kx, kp = jax.random.split(key)

    B = 2
    seq_len, pred_len = 12, 4           # T = 16
    d_model, d_ff = 16, 32
    num_kernels, top_k = 2, 2

    T = seq_len + pred_len
    x = jax.random.normal(kx, (B, T, d_model), dtype=jnp.float32)

    block = TimesBlockPallas(seq_len, pred_len, d_model, d_ff, num_kernels, top_k, kp)
    y = block(x)
    jax.block_until_ready(y)

    assert y.shape == (B, T, d_model), y.shape
    assert bool(jnp.all(jnp.isfinite(y)))
    print("KERNEL_OK")
</pallas_src>

<mosaic_0001>
module attributes {stable_mosaic.version = 11 : i64} {
  func.func @_times_branch_kernel(%arg0: i32, %arg1: i32, %arg2: memref<1x40x144xbf16, #tpu.memory_space<vmem>>, %arg3: memref<144x32xbf16, #tpu.memory_space<vmem>>, %arg4: memref<1x32xf32, #tpu.memory_space<vmem>>, %arg5: memref<9x32x16xbf16, #tpu.memory_space<vmem>>, %arg6: memref<1x16xf32, #tpu.memory_space<vmem>>, %arg7: memref<1x40x16xf32, #tpu.memory_space<vmem>>, %arg8: memref<1x40x16xf32, #tpu.memory_space<vmem>>) attributes {dimension_semantics = [#tpu.dimension_semantics<parallel>, #tpu.dimension_semantics<arbitrary>], iteration_bounds = array<i64: 2, 1>, scalar_prefetch = 0 : i64, scratch_operands = 1 : i64, tpu.core_type = #tpu.core_type<tc>, window_params = [{transform_indices = @transform_0, window_bounds = array<i64: 1, 40, 144>}, {transform_indices = @transform_1, window_bounds = array<i64: 144, 32>}, {transform_indices = @transform_2, window_bounds = array<i64: 1, 32>}, {transform_indices = @transform_3, window_bounds = array<i64: 9, 32, 16>}, {pipeline_mode = #tpu.pipeline_mode<synchronous>, transform_indices = @transform_4, window_bounds = array<i64: 1, 16>}, {transform_indices = @transform_5, window_bounds = array<i64: 1, 40, 16>}]} {
    %c0_i32 = arith.constant 0 : i32
    %0 = arith.cmpi eq, %arg1, %c0_i32 : i32
    %1 = arith.extui %0 : i1 to i32
    %c0_i32_0 = arith.constant 0 : i32
    %2 = arith.cmpi ne, %1, %c0_i32_0 : i32
    scf.if %2 {
      %cst_65 = arith.constant 0.000000e+00 : f32
      %145 = vector.broadcast %cst_65 : f32 to vector<1x40x16xf32>
      %c0_66 = arith.constant 0 : index
      %c0_67 = arith.constant 0 : index
      %c0_68 = arith.constant 0 : index
      %146 = vector.load %arg8[%c0_66, %c0_67, %c0_68] : memref<1x40x16xf32, #tpu.memory_space<vmem>>, vector<1x40x16xf32>
      tpu.vector_store %arg8[%c0_66, %c0_67, %c0_68], %145 {strides = array<i32>} : memref<1x40x16xf32, #tpu.memory_space<vmem>>, vector<1x40x16xf32>,
    } else {
    }
    %3 = tpu.iota {dimensions = array<i32: 0>} : vector<40x1xi32>
    %4 = arith.sitofp %3 : vector<40x1xi32> to vector<40x1xf32>
    %cst = arith.constant 5.000000e-01 : f32
    %5 = vector.broadcast %cst : f32 to vector<40x1xf32>
    %6 = arith.addf %4, %5 : vector<40x1xf32>
    %cst_1 = arith.constant 2.500000e-01 : f32
    %7 = vector.broadcast %cst_1 : f32 to vector<40x1xf32>
    %8 = arith.mulf %6, %7 : vector<40x1xf32>
    %9 = math.floor %8 : vector<40x1xf32>
    %cst_2 = arith.constant 4.000000e+00 : f32
    %10 = vector.broadcast %cst_2 : f32 to vector<40x1xf32>
    %11 = arith.mulf %9, %10 : vector<40x1xf32>
    %12 = arith.subf %4, %11 : vector<40x1xf32>
    %cst_3 = arith.constant 1.000000e+00 : f32
    %13 = vector.broadcast %cst_3 : f32 to vector<40x1xf32>
    %14 = arith.cmpf oge, %9, %13 : vector<40x1xf32>
    %cst_4 = arith.constant 9.000000e+00 : f32
    %15 = vector.broadcast %cst_4 : f32 to vector<40x1xf32>
    %16 = arith.cmpf olt, %9, %15 : vector<40x1xf32>
    %17 = arith.andi %14, %16 : vector<40x1xi1>
    %cst_5 = arith.constant 1.000000e+00 : f32
    %18 = vector.broadcast %cst_5 : f32 to vector<40x1xf32>
    %19 = arith.cmpf oge, %12, %18 : vector<40x1xf32>
    %20 = arith.andi %17, %19 : vector<40x1xi1>
    %cst_6 = arith.constant 3.000000e+00 : f32
    %21 = vector.broadcast %cst_6 : f32 to vector<40x1xf32>
    %22 = arith.cmpf olt, %12, %21 : vector<40x1xf32>
    %23 = arith.andi %20, %22 : vector<40x1xi1>
    %24 = arith.extui %23 : vector<40x1xi1> to vector<40x1xi32>
    %25 = arith.sitofp %24 : vector<40x1xi32> to vector<40x1xf32>
    %c0 = arith.constant 0 : index
    %c0_7 = arith.constant 0 : index
    %c0_8 = arith.constant 0 : index
    %26 = vector.load %arg2[%c0, %c0_7, %c0_8] : memref<1x40x144xbf16, #tpu.memory_space<vmem>>, vector<1x40x144xbf16>
    %27 = vector.shape_cast %26 : vector<1x40x144xbf16> to vector<40x144xbf16>
    %c0_9 = arith.constant 0 : index
    %c0_10 = arith.constant 0 : index
    %28 = vector.load %arg3[%c0_9, %c0_10] : memref<144x32xbf16, #tpu.memory_space<vmem>>, vector<144x32xbf16>
    %cst_11 = arith.constant dense<0.000000e+00> : vector<40x32xf32>
    %29 = tpu.matmul %27, %28, %cst_11 {dimension_numbers = #tpu.dot_dimension_numbers<[1], [0], [0], [1], [0, 0, 1, 1], [], []>} : vector<40x144xbf16>, vector<144x32xbf16>, vector<40x32xf32> -> vector<40x32xf32>
    %c0_12 = arith.constant 0 : index
    %c0_13 = arith.constant 0 : index
    %30 = vector.load %arg4[%c0_12, %c0_13] : memref<1x32xf32, #tpu.memory_space<vmem>>, vector<1x32xf32>
    %31 = vector.broadcast %30 : vector<1x32xf32> to vector<40x32xf32>
    %32 = arith.addf %29, %31 : vector<40x32xf32>
    %cst_14 = arith.constant 5.000000e-01 : f32
    %33 = vector.broadcast %cst_14 : f32 to vector<40x32xf32>
    %34 = arith.mulf %33, %32 : vector<40x32xf32>
    %cst_15 = arith.constant 0.707106769 : f32
    %35 = vector.broadcast %cst_15 : f32 to vector<40x32xf32>
    %36 = arith.mulf %32, %35 : vector<40x32xf32>
    %37 = math.absf %36 : vector<40x32xf32>
    %cst_16 = arith.constant 0.327591091 : f32
    %38 = vector.broadcast %cst_16 : f32 to vector<40x32xf32>
    %39 = arith.mulf %38, %37 : vector<40x32xf32>
    %cst_17 = arith.constant 1.000000e+00 : f32
    %40 = vector.broadcast %cst_17 : f32 to vector<40x32xf32>
    %41 = arith.addf %40, %39 : vector<40x32xf32>
    %42 = tpu.reciprocal %41 {approx = true} : vector<40x32xf32> -> vector<40x32xf32>
    %cst_18 = arith.constant 1.06140542 : f32
    %43 = vector.broadcast %cst_18 : f32 to vector<40x32xf32>
    %44 = arith.mulf %43, %42 : vector<40x32xf32>
    %cst_19 = arith.constant -1.45315206 : f32
    %45 = vector.broadcast %cst_19 : f32 to vector<40x32xf32>
    %46 = arith.addf %44, %45 : vector<40x32xf32>
    %47 = arith.mulf %46, %42 : vector<40x32xf32>
    %cst_20 = arith.constant 1.42141378 : f32
    %48 = vector.broadcast %cst_20 : f32 to vector<40x32xf32>
    %49 = arith.addf %47, %48 : vector<40x32xf32>
    %50 = arith.mulf %49, %42 : vector<40x32xf32>
    %cst_21 = arith.constant -0.284496725 : f32
    %51 = vector.broadcast %cst_21 : f32 to vector<40x32xf32>
    %52 = arith.addf %50, %51 : vector<40x32xf32>
    %53 = arith.mulf %52, %42 : vector<40x32xf32>
    %cst_22 = arith.constant 0.254829586 : f32
    %54 = vector.broadcast %cst_22 : f32 to vector<40x32xf32>
    %55 = arith.addf %53, %54 : vector<40x32xf32>
    %56 = arith.mulf %55, %42 : vector<40x32xf32>
    %cst_23 = arith.constant 0.000000e+00 : f32
    %57 = vector.broadcast %cst_23 : f32 to vector<40x32xf32>
    %58 = arith.subf %57, %37 : vector<40x32xf32>
    %59 = arith.mulf %58, %37 : vector<40x32xf32>
    %60 = math.exp %59 : vector<40x32xf32>
    %61 = arith.mulf %56, %60 : vector<40x32xf32>
    %cst_24 = arith.constant 1.000000e+00 : f32
    %62 = vector.broadcast %cst_24 : f32 to vector<40x32xf32>
    %63 = arith.subf %62, %61 : vector<40x32xf32>
    %cst_25 = arith.constant 0.000000e+00 : f32
    %64 = vector.broadcast %cst_25 : f32 to vector<40x32xf32>
    %65 = arith.cmpf oge, %36, %64 : vector<40x32xf32>
    %cst_26 = arith.constant 0.000000e+00 : f32
    %66 = vector.broadcast %cst_26 : f32 to vector<40x32xf32>
    %67 = arith.subf %66, %63 : vector<40x32xf32>
    %68 = arith.select %65, %63, %67 : vector<40x32xi1>, vector<40x32xf32>
    %cst_27 = arith.constant 1.000000e+00 : f32
    %69 = vector.broadcast %cst_27 : f32 to vector<40x32xf32>
    %70 = arith.addf %69, %68 : vector<40x32xf32>
    %71 = arith.mulf %34, %70 : vector<40x32xf32>
    %72 = vector.broadcast %25 : vector<40x1xf32> to vector<40x32xf32>
    %73 = arith.mulf %71, %72 : vector<40x32xf32>
    %74 = arith.truncf %73 : vector<40x32xf32> to vector<40x32xbf16>
    %cst_28 = arith.constant 0.000000e+00 : f32
    %75 = vector.broadcast %cst_28 : f32 to vector<40x16xf32>
    %c0_29 = arith.constant 0 : index
    %c0_30 = arith.constant 0 : index
    %c0_31 = arith.constant 0 : index
    %76 = vector.load %arg5[%c0_29, %c0_30, %c0_31] : memref<9x32x16xbf16, #tpu.memory_space<vmem>>, vector<1x32x16xbf16>
    %77 = vector.shape_cast %76 : vector<1x32x16xbf16> to vector<32x16xbf16>
    %cst_32 = arith.constant dense<0.000000e+00> : vector<40x16xf32>
    %78 = tpu.matmul %74, %77, %cst_32 {dimension_numbers = #tpu.dot_dimension_numbers<[1], [0], [0], [1], [0, 0, 1, 1], [], []>} : vector<40x32xbf16>, vector<32x16xbf16>, vector<40x16xf32> -> vector<40x16xf32>
    %79 = vector.extract_strided_slice %78 {offsets = [35, 0], sizes = [5, 16], strides = [1, 1]} : vector<40x16xf32> to vector<5x16xf32>
    %80 = vector.extract_strided_slice %78 {offsets = [0, 0], sizes = [35, 16], strides = [1, 1]} : vector<40x16xf32> to vector<35x16xf32>
    %81 = tpu.concatenate %79, %80 in 0 : vector<5x16xf32>, vector<35x16xf32> -> vector<40x16xf32>
    %82 = arith.addf %75, %81 : vector<40x16xf32>
    %c1 = arith.constant 1 : index
    %c0_33 = arith.constant 0 : index
    %c0_34 = arith.constant 0 : index
    %83 = vector.load %arg5[%c1, %c0_33, %c0_34] : memref<9x32x16xbf16, #tpu.memory_space<vmem>>, vector<1x32x16xbf16>
    %84 = vector.shape_cast %83 : vector<1x32x16xbf16> to vector<32x16xbf16>
    %cst_35 = arith.constant dense<0.000000e+00> : vector<40x16xf32>
    %85 = tpu.matmul %74, %84, %cst_35 {dimension_numbers = #tpu.dot_dimension_numbers<[1], [0], [0], [1], [0, 0, 1, 1], [], []>} : vector<40x32xbf16>, vector<32x16xbf16>, vector<40x16xf32> -> vector<40x16xf32>
    %86 = vector.extract_strided_slice %85 {offsets = [36, 0], sizes = [4, 16], strides = [1, 1]} : vector<40x16xf32> to vector<4x16xf32>
    %87 = vector.extract_strided_slice %85 {offsets = [0, 0], sizes = [36, 16], strides = [1, 1]} : vector<40x16xf32> to vector<36x16xf32>
    %88 = tpu.concatenate %86, %87 in 0 : vector<4x16xf32>, vector<36x16xf32> -> vector<40x16xf32>
    %89 = arith.addf %82, %88 : vector<40x16xf32>
    %c2 = arith.constant 2 : index
    %c0_36 = arith.constant 0 : index
    %c0_37 = arith.constant 0 : index
    %90 = vector.load %arg5[%c2, %c0_36, %c0_37] : memref<9x32x16xbf16, #tpu.memory_space<vmem>>, vector<1x32x16xbf16>
    %91 = vector.shape_cast %90 : vector<1x32x16xbf16> to vector<32x16xbf16>
    %cst_38 = arith.constant dense<0.000000e+00> : vector<40x16xf32>
    %92 = tpu.matmul %74, %91, %cst_38 {dimension_numbers = #tpu.dot_dimension_numbers<[1], [0], [0], [1], [0, 0, 1, 1], [], []>} : vector<40x32xbf16>, vector<32x16xbf16>, vector<40x16xf32> -> vector<40x16xf32>
    %93 = vector.extract_strided_slice %92 {offsets = [37, 0], sizes = [3, 16], strides = [1, 1]} : vector<40x16xf32> to vector<3x16xf32>
    %94 = vector.extract_strided_slice %92 {offsets = [0, 0], sizes = [37, 16], strides = [1, 1]} : vector<40x16xf32> to vector<37x16xf32>
    %95 = tpu.concatenate %93, %94 in 0 : vector<3x16xf32>, vector<37x16xf32> -> vector<40x16xf32>
    %96 = arith.addf %89, %95 : vector<40x16xf32>
    %c3 = arith.constant 3 : index
    %c0_39 = arith.constant 0 : index
    %c0_40 = arith.constant 0 : index
    %97 = vector.load %arg5[%c3, %c0_39, %c0_40] : memref<9x32x16xbf16, #tpu.memory_space<vmem>>, vector<1x32x16xbf16>
    %98 = vector.shape_cast %97 : vector<1x32x16xbf16> to vector<32x16xbf16>
    %cst_41 = arith.constant dense<0.000000e+00> : vector<40x16xf32>
    %99 = tpu.matmul %74, %98, %cst_41 {dimension_numbers = #tpu.dot_dimension_numbers<[1], [0], [0], [1], [0, 0, 1, 1], [], []>} : vector<40x32xbf16>, vector<32x16xbf16>, vector<40x16xf32> -> vector<40x16xf32>
    %100 = vector.extract_strided_slice %99 {offsets = [39, 0], sizes = [1, 16], strides = [1, 1]} : vector<40x16xf32> to vector<1x16xf32>
    %101 = vector.extract_strided_slice %99 {offsets = [0, 0], sizes = [39, 16], strides = [1, 1]} : vector<40x16xf32> to vector<39x16xf32>
    %102 = tpu.concatenate %100, %101 in 0 : vector<1x16xf32>, vector<39x16xf32> -> vector<40x16xf32>
    %103 = arith.addf %96, %102 : vector<40x16xf32>
    %c4 = arith.constant 4 : index
    %c0_42 = arith.constant 0 : index
    %c0_43 = arith.constant 0 : index
    %104 = vector.load %arg5[%c4, %c0_42, %c0_43] : memref<9x32x16xbf16, #tpu.memory_space<vmem>>, vector<1x32x16xbf16>
    %105 = vector.shape_cast %104 : vector<1x32x16xbf16> to vector<32x16xbf16>
    %cst_44 = arith.constant dense<0.000000e+00> : vector<40x16xf32>
    %106 = tpu.matmul %74, %105, %cst_44 {dimension_numbers = #tpu.dot_dimension_numbers<[1], [0], [0], [1], [0, 0, 1, 1], [], []>} : vector<40x32xbf16>, vector<32x16xbf16>, vector<40x16xf32> -> vector<40x16xf32>
    %107 = arith.addf %103, %106 : vector<40x16xf32>
    %c5 = arith.constant 5 : index
    %c0_45 = arith.constant 0 : index
    %c0_46 = arith.constant 0 : index
    %108 = vector.load %arg5[%c5, %c0_45, %c0_46] : memref<9x32x16xbf16, #tpu.memory_space<vmem>>, vector<1x32x16xbf16>
    %109 = vector.shape_cast %108 : vector<1x32x16xbf16> to vector<32x16xbf16>
    %cst_47 = arith.constant dense<0.000000e+00> : vector<40x16xf32>
    %110 = tpu.matmul %74, %109, %cst_47 {dimension_numbers = #tpu.dot_dimension_numbers<[1], [0], [0], [1], [0, 0, 1, 1], [], []>} : vector<40x32xbf16>, vector<32x16xbf16>, vector<40x16xf32> -> vector<40x16xf32>
    %111 = vector.extract_strided_slice %110 {offsets = [1, 0], sizes = [39, 16], strides = [1, 1]} : vector<40x16xf32> to vector<39x16xf32>
    %112 = vector.extract_strided_slice %110 {offsets = [0, 0], sizes = [1, 16], strides = [1, 1]} : vector<40x16xf32> to vector<1x16xf32>
    %113 = tpu.concatenate %111, %112 in 0 : vector<39x16xf32>, vector<1x16xf32> -> vector<40x16xf32>
    %114 = arith.addf %107, %113 : vector<40x16xf32>
    %c6 = arith.constant 6 : index
    %c0_48 = arith.constant 0 : index
    %c0_49 = arith.constant 0 : index
    %115 = vector.load %arg5[%c6, %c0_48, %c0_49] : memref<9x32x16xbf16, #tpu.memory_space<vmem>>, vector<1x32x16xbf16>
    %116 = vector.shape_cast %115 : vector<1x32x16xbf16> to vector<32x16xbf16>
    %cst_50 = arith.constant dense<0.000000e+00> : vector<40x16xf32>
    %117 = tpu.matmul %74, %116, %cst_50 {dimension_numbers = #tpu.dot_dimension_numbers<[1], [0], [0], [1], [0, 0, 1, 1], [], []>} : vector<40x32xbf16>, vector<32x16xbf16>, vector<40x16xf32> -> vector<40x16xf32>
    %118 = vector.extract_strided_slice %117 {offsets = [3, 0], sizes = [37, 16], strides = [1, 1]} : vector<40x16xf32> to vector<37x16xf32>
    %119 = vector.extract_strided_slice %117 {offsets = [0, 0], sizes = [3, 16], strides = [1, 1]} : vector<40x16xf32> to vector<3x16xf32>
    %120 = tpu.concatenate %118, %119 in 0 : vector<37x16xf32>, vector<3x16xf32> -> vector<40x16xf32>
    %121 = arith.addf %114, %120 : vector<40x16xf32>
    %c7 = arith.constant 7 : index
    %c0_51 = arith.constant 0 : index
    %c0_52 = arith.constant 0 : index
    %122 = vector.load %arg5[%c7, %c0_51, %c0_52] : memref<9x32x16xbf16, #tpu.memory_space<vmem>>, vector<1x32x16xbf16>
    %123 = vector.shape_cast %122 : vector<1x32x16xbf16> to vector<32x16xbf16>
    %cst_53 = arith.constant dense<0.000000e+00> : vector<40x16xf32>
    %124 = tpu.matmul %74, %123, %cst_53 {dimension_numbers = #tpu.dot_dimension_numbers<[1], [0], [0], [1], [0, 0, 1, 1], [], []>} : vector<40x32xbf16>, vector<32x16xbf16>, vector<40x16xf32> -> vector<40x16xf32>
    %125 = vector.extract_strided_slice %124 {offsets = [4, 0], sizes = [36, 16], strides = [1, 1]} : vector<40x16xf32> to vector<36x16xf32>
    %126 = vector.extract_strided_slice %124 {offsets = [0, 0], sizes = [4, 16], strides = [1, 1]} : vector<40x16xf32> to vector<4x16xf32>
    %127 = tpu.concatenate %125, %126 in 0 : vector<36x16xf32>, vector<4x16xf32> -> vector<40x16xf32>
    %128 = arith.addf %121, %127 : vector<40x16xf32>
    %c8 = arith.constant 8 : index
    %c0_54 = arith.constant 0 : index
    %c0_55 = arith.constant 0 : index
    %129 = vector.load %arg5[%c8, %c0_54, %c0_55] : memref<9x32x16xbf16, #tpu.memory_space<vmem>>, vector<1x32x16xbf16>
    %130 = vector.shape_cast %129 : vector<1x32x16xbf16> to vector<32x16xbf16>
    %cst_56 = arith.constant dense<0.000000e+00> : vector<40x16xf32>
    %131 = tpu.matmul %74, %130, %cst_56 {dimension_numbers = #tpu.dot_dimension_numbers<[1], [0], [0], [1], [0, 0, 1, 1], [], []>} : vector<40x32xbf16>, vector<32x16xbf16>, vector<40x16xf32> -> vector<40x16xf32>
    %132 = vector.extract_strided_slice %131 {offsets = [5, 0], sizes = [35, 16], strides = [1, 1]} : vector<40x16xf32> to vector<35x16xf32>
    %133 = vector.extract_strided_slice %131 {offsets = [0, 0], sizes = [5, 16], strides = [1, 1]} : vector<40x16xf32> to vector<5x16xf32>
    %134 = tpu.concatenate %132, %133 in 0 : vector<35x16xf32>, vector<5x16xf32> -> vector<40x16xf32>
    %135 = arith.addf %128, %134 : vector<40x16xf32>
    %c0_57 = arith.constant 0 : index
    %c0_58 = arith.constant 0 : index
    %c0_59 = arith.constant 0 : index
    %136 = vector.load %arg8[%c0_57, %c0_58, %c0_59] : memref<1x40x16xf32, #tpu.memory_space<vmem>>, vector<1x40x16xf32>
    %137 = vector.shape_cast %136 : vector<1x40x16xf32> to vector<40x16xf32>
    %138 = arith.addf %137, %135 : vector<40x16xf32>
    %c0_60 = arith.constant 0 : index
    %c0_61 = arith.constant 0 : index
    %c0_62 = arith.constant 0 : index
    %139 = vector.load %arg8[%c0_60, %c0_61, %c0_62] : memref<1x40x16xf32, #tpu.memory_space<vmem>>, vector<1x40x16xf32>
    %140 = vector.shape_cast %139 : vector<1x40x16xf32> to vector<40x16xf32>
    %141 = vector.shape_cast %138 : vector<40x16xf32> to vector<1x40x16xf32>
    tpu.vector_store %arg8[%c0_60, %c0_61, %c0_62], %141 {strides = array<i32>} : memref<1x40x16xf32, #tpu.memory_space<vmem>>, vector<1x40x16xf32>,
    %c0_i32_63 = arith.constant 0 : i32
    %142 = arith.cmpi eq, %arg1, %c0_i32_63 : i32
    %143 = arith.extui %142 : i1 to i32
    %c0_i32_64 = arith.constant 0 : i32
    %144 = arith.cmpi ne, %143, %c0_i32_64 : i32
    scf.if %144 {
      %c0_65 = arith.constant 0 : index
      %c0_66 = arith.constant 0 : index
      %c0_67 = arith.constant 0 : index
      %145 = vector.load %arg8[%c0_65, %c0_66, %c0_67] : memref<1x40x16xf32, #tpu.memory_space<vmem>>, vector<1x40x16xf32>
      %c0_68 = arith.constant 0 : index
      %c0_69 = arith.constant 0 : index
      %146 = vector.load %arg6[%c0_68, %c0_69] : memref<1x16xf32, #tpu.memory_space<vmem>>, vector<1x16xf32>
      %147 = vector.shape_cast %146 : vector<1x16xf32> to vector<1x1x16xf32>
      %148 = vector.broadcast %147 : vector<1x1x16xf32> to vector<1x40x16xf32>
      %149 = arith.addf %145, %148 : vector<1x40x16xf32>
      %c0_70 = arith.constant 0 : index
      %c0_71 = arith.constant 0 : index
      %c0_72 = arith.constant 0 : index
      %150 = vector.load %arg7[%c0_70, %c0_71, %c0_72] : memref<1x40x16xf32, #tpu.memory_space<vmem>>, vector<1x40x16xf32>
      tpu.vector_store %arg7[%c0_70, %c0_71, %c0_72], %149 {strides = array<i32>} : memref<1x40x16xf32, #tpu.memory_space<vmem>>, vector<1x40x16xf32>,
    } else {
    }
    return
  }
  func.func @transform_0(%arg0: i32, %arg1: i32) -> (i32, i32, i32) {
    %c0_i32 = arith.constant 0 : i32
    %c0_i32_0 = arith.constant 0 : i32
    %c0_i32_1 = arith.constant 0 : i32
    return %arg0, %c0_i32, %c0_i32_0 : i32, i32, i32
  }
  func.func @transform_1(%arg0: i32, %arg1: i32) -> (i32, i32) {
    %c0_i32 = arith.constant 0 : i32
    %c0_i32_0 = arith.constant 0 : i32
    return %c0_i32, %arg1 : i32, i32
  }
  func.func @transform_2(%arg0: i32, %arg1: i32) -> (i32, i32) {
    %c0_i32 = arith.constant 0 : i32
    %c0_i32_0 = arith.constant 0 : i32
    return %c0_i32, %arg1 : i32, i32
  }
  func.func @transform_3(%arg0: i32, %arg1: i32) -> (i32, i32, i32) {
    %c0_i32 = arith.constant 0 : i32
    %c0_i32_0 = arith.constant 0 : i32
    %c0_i32_1 = arith.constant 0 : i32
    return %c0_i32, %arg1, %c0_i32_0 : i32, i32, i32
  }
  func.func @transform_4(%arg0: i32, %arg1: i32) -> (i32, i32) {
    %c0_i32 = arith.constant 0 : i32
    %c0_i32_0 = arith.constant 0 : i32
    %c0_i32_1 = arith.constant 0 : i32
    return %c0_i32, %c0_i32_0 : i32, i32
  }
  func.func @transform_5(%arg0: i32, %arg1: i32) -> (i32, i32, i32) {
    %c0_i32 = arith.constant 0 : i32
    %c0_i32_0 = arith.constant 0 : i32
    %c0_i32_1 = arith.constant 0 : i32
    return %arg0, %c0_i32, %c0_i32_0 : i32, i32, i32
  }
}

</mosaic_0001>

<llo_original>
// kernel: tpu_custom_call.1
$region0: #{tpu_custom_call.1}
  #allocation0 [shape = 'u32[]', space=smem, size = 0x4, offset = 0x4, fixed_abs, tag = 'smem constant byte address 0x4 - core index']
  #allocation1 [shape = 'u32[72,128]{1,0:T(1,128)}', space=vmem, size = 0x9000, scoped, tag = 'internal scratch']
  #allocation2 [shape = 'f32[1,40,16]{2,1,0:T(8,128)}', space=vmem, size = 0x5000, scoped, tag = 'scratch operand']
  %s0 = inlined_call_operand.vmem [shape: bf16[2,40,144], index: 0, kind: input, shape index: {}]
  %s1 = inlined_call_operand.vmem [shape: bf16[144,32], index: 1, kind: input, shape index: {}]
  %s2 = inlined_call_operand.vmem [shape: f32[1,32], index: 2, kind: input, shape index: {}]
  %s3 = inlined_call_operand.vmem [shape: bf16[9,32,16], index: 3, kind: input, shape index: {}]
  %s4 = inlined_call_operand.vmem [shape: f32[1,16], index: 4, kind: input, shape index: {}]
  %s5 = inlined_call_operand.vmem [shape: f32[2,40,16], index: 5, kind: output, shape index: {}]
  %s6 = sld [smem:[#allocation0]]
  $region61: #{tpu_custom_call.1} parent=0
    _
  %s8 = ssub.s32 1, %s6
  %s9 = scalar_select 0, %s8, %s6
  loop: start=0, step=1, limit=4
  $region2: #{tpu_custom_call.1} parent=0 // loop_pre_header
    _
  $region3: #{tpu_custom_call.1} parent=0 // loop_header
    %s11 = sphi 0, %s15
    %p12 = scmp.ge.s32.totalorder %s11, 4
    %s18 = sphi 0, %s30
    %s19 = sphi 0, %s26
    %s20 = sphi 0, %s18
    %s21 = sphi 0, %s19
    %s22 = sphi 0, %s20
    %s23 = sphi 0, %s21
    %s33 = sphi 0, %s35
    %s36 = sphi 0, %s33
    %s37 = sphi 0, %s36
    %s53 = sphi 0, %s37
    %s59 = sphi 0, %s61
    %s62 = sphi 0, %s59
    %s63 = sphi 0, %s62
    %s79 = sphi 0, %s63
    %s85 = sphi 0, %s87
    %s88 = sphi 0, %s85
    %s89 = sphi 0, %s88
    %s105 = sphi 0, %s89
    %s111 = sphi 0, %s113
    %s114 = sphi 0, %s111
    %s115 = sphi 0, %s114
    %s131 = sphi 0, %s115
    %s135 = sphi 0, %s135
    %s137 = sphi 0, %s135
    %s138 = sphi 0, %s137
    %s152 = sphi 0, %s138
    %s158 = sphi 0, %s160
    %s161 = sphi 0, %s158
    %s162 = sphi 0, %s161
    %s178 = sphi 0, %s162
  $region4: #{tpu_custom_call.1} parent=0 // loop_header_branch
    %14 = sbr.rel (%p12) target = $region8
  $region5: #{tpu_custom_call.1} parent=0 // loop_body
    %s16 = ssub.s32 %s11, 1
    %s17 = ssub.s32 %s11, 2
    %s24 = sadd.s32 1, %s19
    %p25 = scmp.ge.s32.totalorder %s24, 1
    %s26 = scalar_select %p25, 0, %s24
    %s27 = sadd.s32 1, %s18
    %s28 = scalar_select %p25, %s27, %s18
    %p29 = scmp.ge.s32.totalorder %s28, 2
    %s30 = scalar_select %p29, 0, %s28
    %s31 = ssub.s32 %s18, %s30
    %p32 = scmp.eq.s32.totalorder %s31, 0
    %s34 = sadd.s32 %s33, 1
    %s35 = scalar_select %p32, %s33, %s34
    %p38 = pneg %p32
    %p39 = scmp.eq.s32.totalorder %s11, 1
    %p40 = por %p38, %p39
    %p41 = scmp.ne.s32.totalorder %s33, %s36
    %p42 = scmp.eq.s32.totalorder %s11, 0
    %p43 = por %p41, %p42
    %p44 = scmp.ne.s32.totalorder %s33, %s36
    %p45 = scmp.eq.s32.totalorder %s16, 1
    %p46 = por %p44, %p45
    %p47 = scmp.ne.s32.totalorder %s36, %s37
    %p48 = scmp.eq.s32.totalorder %s16, 0
    %p49 = por %p47, %p48
    %p50 = scmp.ne.s32.totalorder %s36, %s37
    %p51 = scmp.eq.s32.totalorder %s17, 1
    %p52 = por %p50, %p51
    %p54 = scmp.ne.s32.totalorder %s37, %s53
    %p55 = scmp.eq.s32.totalorder %s17, 0
    %p56 = por %p54, %p55
    %s57 = ssub.s32 %s19, %s26
    %p58 = scmp.eq.s32.totalorder %s57, 0
    %s60 = sadd.s32 %s59, 1
    %s61 = scalar_select %p58, %s59, %s60
    %p64 = pneg %p58
    %p65 = scmp.eq.s32.totalorder %s11, 1
    %p66 = por %p64, %p65
    %p67 = scmp.ne.s32.totalorder %s59, %s62
    %p68 = scmp.eq.s32.totalorder %s11, 0
    %p69 = por %p67, %p68
    %p70 = scmp.ne.s32.totalorder %s59, %s62
    %p71 = scmp.eq.s32.totalorder %s16, 1
    %p72 = por %p70, %p71
    %p73 = scmp.ne.s32.totalorder %s62, %s63
    %p74 = scmp.eq.s32.totalorder %s16, 0
    %p75 = por %p73, %p74
    %p76 = scmp.ne.s32.totalorder %s62, %s63
    %p77 = scmp.eq.s32.totalorder %s17, 1
    %p78 = por %p76, %p77
    %p80 = scmp.ne.s32.totalorder %s63, %s79
    %p81 = scmp.eq.s32.totalorder %s17, 0
    %p82 = por %p80, %p81
    %s83 = ssub.s32 %s19, %s26
    %p84 = scmp.eq.s32.totalorder %s83, 0
    %s86 = sadd.s32 %s85, 1
    %s87 = scalar_select %p84, %s85, %s86
    %p90 = pneg %p84
    %p91 = scmp.eq.s32.totalorder %s11, 1
    %p92 = por %p90, %p91
    %p93 = scmp.ne.s32.totalorder %s85, %s88
    %p94 = scmp.eq.s32.totalorder %s11, 0
    %p95 = por %p93, %p94
    %p96 = scmp.ne.s32.totalorder %s85, %s88
    %p97 = scmp.eq.s32.totalorder %s16, 1
    %p98 = por %p96, %p97
    %p99 = scmp.ne.s32.totalorder %s88, %s89
    %p100 = scmp.eq.s32.totalorder %s16, 0
    %p101 = por %p99, %p100
    %p102 = scmp.ne.s32.totalorder %s88, %s89
    %p103 = scmp.eq.s32.totalorder %s17, 1
    %p104 = por %p102, %p103
    %p106 = scmp.ne.s32.totalorder %s89, %s105
    %p107 = scmp.eq.s32.totalorder %s17, 0
    %p108 = por %p106, %p107
    %s109 = ssub.s32 %s19, %s26
    %p110 = scmp.eq.s32.totalorder %s109, 0
    %s112 = sadd.s32 %s111, 1
    %s113 = scalar_select %p110, %s111, %s112
    %p116 = pneg %p110
    %p117 = scmp.eq.s32.totalorder %s11, 1
    %p118 = por %p116, %p117
    %p119 = scmp.ne.s32.totalorder %s111, %s114
    %p120 = scmp.eq.s32.totalorder %s11, 0
    %p121 = por %p119, %p120
    %p122 = scmp.ne.s32.totalorder %s111, %s114
    %p123 = scmp.eq.s32.totalorder %s16, 1
    %p124 = por %p122, %p123
    %p125 = scmp.ne.s32.totalorder %s114, %s115
    %p126 = scmp.eq.s32.totalorder %s16, 0
    %p127 = por %p125, %p126
    %p128 = scmp.ne.s32.totalorder %s114, %s115
    %p129 = scmp.eq.s32.totalorder %s17, 1
    %p130 = por %p128, %p129
    %p132 = scmp.ne.s32.totalorder %s115, %s131
    %p133 = scmp.eq.s32.totalorder %s17, 0
    %p134 = por %p132, %p133
    %s136 = sadd.s32 %s135, 1
    %p139 = scmp.eq.s32.totalorder %s11, 1
    %p140 = scmp.ne.s32.totalorder %s135, %s137
    %p141 = scmp.eq.s32.totalorder %s11, 0
    %p142 = por %p140, %p141
    %p143 = scmp.ne.s32.totalorder %s135, %s137
    %p144 = scmp.eq.s32.totalorder %s16, 1
    %p145 = por %p143, %p144
    %p146 = scmp.ne.s32.totalorder %s137, %s138
    %p147 = scmp.eq.s32.totalorder %s16, 0
    %p148 = por %p146, %p147
    %p149 = scmp.ne.s32.totalorder %s137, %s138
    %p150 = scmp.eq.s32.totalorder %s17, 1
    %p151 = por %p149, %p150
    %p153 = scmp.ne.s32.totalorder %s138, %s152
    %p154 = scmp.eq.s32.totalorder %s17, 0
    %p155 = por %p153, %p154
    %s156 = ssub.s32 %s18, %s30
    %p157 = scmp.eq.s32.totalorder %s156, 0
    %s159 = sadd.s32 %s158, 1
    %s160 = scalar_select %p157, %s158, %s159
    %p163 = pneg %p157
    %p164 = scmp.eq.s32.totalorder %s11, 1
    %p165 = por %p163, %p164
    %p166 = scmp.ne.s32.totalorder %s158, %s161
    %p167 = scmp.eq.s32.totalorder %s11, 0
    %p168 = por %p166, %p167
    %p169 = scmp.ne.s32.totalorder %s158, %s161
    %p170 = scmp.eq.s32.totalorder %s16, 1
    %p171 = por %p169, %p170
    %p172 = scmp.ne.s32.totalorder %s161, %s162
    %p173 = scmp.eq.s32.totalorder %s16, 0
    %p174 = por %p172, %p173
    %p175 = scmp.ne.s32.totalorder %s161, %s162
    %p176 = scmp.eq.s32.totalorder %s17, 1
    %p177 = por %p175, %p176
    %p179 = scmp.ne.s32.totalorder %s162, %s178
    %p180 = scmp.eq.s32.totalorder %s17, 0
    %p181 = por %p179, %p180
    %p182 = scmp.le.s32.totalorder 1, %s11
    %p183 = scmp.lt.s32.totalorder %s11, 3
    %p184 = pnand %p182, %p183
    %p185 = pneg %p184
    // Predicated region
    $region9: #{tpu_custom_call.1} parent=5 // pred_check
      _
    $region10: #{tpu_custom_call.1} parent=5 // pred_check_branch
      %187 = sbr.rel (%p184) target = $region12
    $region11: #{tpu_custom_call.1} parent=5 // pred_region
      %s188 = ssub.s32 %s11, 1
      // Predicated region
      $region13: #{tpu_custom_call.1} parent=11 // pred_check
        %p189 = pneg %p75
      $region14: #{tpu_custom_call.1} parent=11 // pred_check_branch
        %191 = sbr.rel (%p189) target = $region16
      $region15: #{tpu_custom_call.1} parent=11 // pred_region
        %p192 = scmp.lt.s32.totalorder %s21, 0
        %s193 = scalar_select %p192, %s21, 0
        %s194 = smul.addr %s193, 4
        %s195 = scalar_lea.vmem %s1, %s194
      $region16: #{tpu_custom_call.1} parent=11 // pred_fallthru
        _
      // Predicated region
      $region17: #{tpu_custom_call.1} parent=11 // pred_check
        %p196 = pneg %p101
      $region18: #{tpu_custom_call.1} parent=11 // pred_check_branch
        %198 = sbr.rel (%p196) target = $region20
      $region19: #{tpu_custom_call.1} parent=11 // pred_region
        %p199 = scmp.lt.s32.totalorder %s21, 0
        %s200 = scalar_select %p199, %s21, 0
        %s201 = scalar_lea.vmem %s2, %s200
      $region20: #{tpu_custom_call.1} parent=11 // pred_fallthru
        _
      // Predicated region
      $region21: #{tpu_custom_call.1} parent=11 // pred_check
        %p202 = pneg %p127
      $region22: #{tpu_custom_call.1} parent=11 // pred_check_branch
        %204 = sbr.rel (%p202) target = $region24
      $region23: #{tpu_custom_call.1} parent=11 // pred_region
        %s205 = smul.u32 4, %s21
        %p206 = scmp.lt.s32.totalorder %s205, 3
        %s207 = scalar_select %p206, %s205, 3
        %s208 = smul.addr %s207, 4
        %s209 = scalar_lea.vmem %s3, %s208
        %s210 = smul.u32 4, %s21
      $region24: #{tpu_custom_call.1} parent=11 // pred_fallthru
        _
      // Predicated region
      $region25: #{tpu_custom_call.1} parent=11 // pred_check
        %p211 = pneg %p148
      $region26: #{tpu_custom_call.1} parent=11 // pred_check_branch
        %213 = sbr.rel (%p211) target = $region28
      $region27: #{tpu_custom_call.1} parent=11 // pred_region
        _
      $region28: #{tpu_custom_call.1} parent=11 // pred_fallthru
        _
    $region12: #{tpu_custom_call.1} parent=5 // pred_fallthru
      _
    %p214 = scmp.lt.s32.totalorder %s11, 2
    // Predicated region
    $region29: #{tpu_custom_call.1} parent=5 // pred_check
      %p215 = pneg %p214
    $region30: #{tpu_custom_call.1} parent=5 // pred_check_branch
      %217 = sbr.rel (%p215) target = $region32
    $region31: #{tpu_custom_call.1} parent=5 // pred_region
      // Predicated region
      $region33: #{tpu_custom_call.1} parent=31 // pred_check
        %p218 = pneg %p43
      $region34: #{tpu_custom_call.1} parent=31 // pred_check_branch
        %220 = sbr.rel (%p218) target = $region36
      $region35: #{tpu_custom_call.1} parent=31 // pred_region
        %p221 = scmp.lt.s32.totalorder %s18, 1
        %s222 = scalar_select %p221, %s18, 1
        %s223 = smul.addr %s222, 10
        %s224 = smul.addr %s223, 4
        %s225 = scalar_lea.vmem %s0, %s224
      $region36: #{tpu_custom_call.1} parent=31 // pred_fallthru
        _
    $region32: #{tpu_custom_call.1} parent=5 // pred_fallthru
      _
    %p226 = scmp.le.s32.totalorder 1, %s11
    %p227 = scmp.lt.s32.totalorder %s11, 3
    %p228 = pnand %p226, %p227
    %p229 = pneg %p228
    // Predicated region
    $region37: #{tpu_custom_call.1} parent=5 // pred_check
      _
    $region38: #{tpu_custom_call.1} parent=5 // pred_check_branch
      %231 = sbr.rel (%p228) target = $region40
    $region39: #{tpu_custom_call.1} parent=5 // pred_region
      %s232 = ssub.s32 %s11, 1
      %p233 = scmp.lt.s32.totalorder %s20, 1
      %s234 = scalar_select %p233, %s20, 1
      %s235 = smul.addr %s234, 10
      %s236 = smul.addr %s235, 4
      %s237 = scalar_lea.vmem %s0, %s236
      %p238 = pneg %p49
      %p239 = pneg %p46
      %p240 = scmp.lt.s32.totalorder %s21, 0
      %s241 = scalar_select %p240, %s21, 0
      %s242 = smul.addr %s241, 4
      %s243 = scalar_lea.vmem %s1, %s242
      %p244 = pneg %p75
      %p245 = pneg %p72
      %p246 = scmp.lt.s32.totalorder %s21, 0
      %s247 = scalar_select %p246, %s21, 0
      %s248 = scalar_lea.vmem %s2, %s247
      %p249 = pneg %p101
      %p250 = pneg %p98
      %s251 = smul.u32 4, %s21
      %p252 = scmp.lt.s32.totalorder %s251, 3
      %s253 = scalar_select %p252, %s251, 3
      %s254 = smul.addr %s253, 4
      %s255 = scalar_lea.vmem %s3, %s254
      %p256 = pneg %p127
      %p257 = pneg %p124
      %p258 = pneg %p148
      %p259 = pneg %p145
      %p260 = pneg %p174
      %p261 = pneg %p171
      %p262 = scmp.lt.s32.totalorder %s20, 1
      %s263 = scalar_select %p262, %s20, 1
      %s264 = smul.addr %s263, 5
      %s265 = smul.addr %s264, 8
      %s266 = scalar_lea.vmem %s5, %s265
      %p267 = scmp.lt.s32.totalorder %s20, 1
      %s268 = scalar_select %p267, %s20, 1
      %s269 = smul.addr %s268, 10
      %s270 = smul.addr %s269, 4
      %s271 = scalar_lea.vmem %s0, %s270
      %p272 = scmp.lt.s32.totalorder %s21, 0
      %s273 = scalar_select %p272, %s21, 0
      %s274 = smul.addr %s273, 4
      %s275 = scalar_lea.vmem %s1, %s274
      %p276 = scmp.lt.s32.totalorder %s21, 0
      %s277 = scalar_select %p276, %s21, 0
      %s278 = scalar_lea.vmem %s2, %s277
      %s279 = smul.u32 4, %s21
      %p280 = scmp.lt.s32.totalorder %s279, 3
      %s281 = scalar_select %p280, %s279, 3
      %s282 = smul.addr %s281, 4
      %s283 = scalar_lea.vmem %s3, %s282
      %s284 = smul.u32 4, %s21
      %p285 = scmp.lt.s32.totalorder %s20, 1
      %s286 = scalar_select %p285, %s20, 1
      %s287 = smul.addr %s286, 5
      %s288 = smul.addr %s287, 8
      %s289 = scalar_lea.vmem %s5, %s288
      %p291 = scmp.eq.s32.totalorder %s21, 0
      // Predicated region
      $region41: #{tpu_custom_call.1} parent=39 // pred_check
        %p292 = pneg %p291
      $region42: #{tpu_custom_call.1} parent=39 // pred_check_branch
        %294 = sbr.rel (%p292) target = $region44
      $region43: #{tpu_custom_call.1} parent=39 // pred_region
        %vm295 = vcmask 130048
        %296 = vst.msk [vmem:[#allocation2] sm:$0xff] %vm295, 0.0
        %297 = vst.msk [vmem:[#allocation2 + $0x8] sm:$0xff] %vm295, 0.0
        %298 = vst.msk [vmem:[#allocation2 + $0x10] sm:$0xff] %vm295, 0.0
        %299 = vst.msk [vmem:[#allocation2 + $0x18] sm:$0xff] %vm295, 0.0
        %300 = vst.msk [vmem:[#allocation2 + $0x20] sm:$0xff] %vm295, 0.0
      $region44: #{tpu_custom_call.1} parent=39 // pred_fallthru
        _
      %v301 = vlaneseq
      %v302 = vshrl.u32 %v301, 7
      %v303 = vadd.s32 %v302, 8
      %v304 = vadd.s32 %v302, 16
      %v305 = vadd.s32 %v302, 24
      %v306 = vadd.s32 %v302, 32
      %v307 = vcvt.s32.f32 %v302
      %v308 = vcvt.s32.f32 %v303
      %v309 = vcvt.s32.f32 %v304
      %v310 = vcvt.s32.f32 %v305
      %v311 = vcvt.s32.f32 %v306
      %v312 = vadd.f32 %v307, 0.5
      %v313 = vadd.f32 %v308, 0.5
      %v314 = vadd.f32 %v309, 0.5
      %v315 = vadd.f32 %v310, 0.5
      %v316 = vadd.f32 %v311, 0.5
      %v317 = vmul.f32 %v312, 0.25
      %v318 = vmul.f32 %v313, 0.25
      %v319 = vmul.f32 %v314, 0.25
      %v320 = vmul.f32 %v315, 0.25
      %v321 = vmul.f32 %v316, 0.25
      %v322 = vfloor.f32 %v317
      %v323 = vfloor.f32 %v318
      %v324 = vfloor.f32 %v319
      %v325 = vfloor.f32 %v320
      %v326 = vfloor.f32 %v321
      %v327 = vmul.f32 %v322, 4.0
      %v328 = vmul.f32 %v323, 4.0
      %v329 = vmul.f32 %v324, 4.0
      %v330 = vmul.f32 %v325, 4.0
      %v331 = vmul.f32 %v326, 4.0
      %v332 = vsub.f32 %v307, %v327
      %v333 = vsub.f32 %v308, %v328
      %v334 = vsub.f32 %v309, %v329
      %v335 = vsub.f32 %v310, %v330
      %v336 = vsub.f32 %v311, %v331
      %vm337 = vcmp.ge.f32.partialorder %v322, 1.0
      %vm338 = vcmp.ge.f32.partialorder %v323, 1.0
      %vm339 = vcmp.ge.f32.partialorder %v324, 1.0
      %vm340 = vcmp.ge.f32.partialorder %v325, 1.0
      %vm341 = vcmp.ge.f32.partialorder %v326, 1.0
      %vm342 = vcmp.lt.f32.partialorder %v322, 9.0
      %vm343 = vcmp.lt.f32.partialorder %v323, 9.0
      %vm344 = vcmp.lt.f32.partialorder %v324, 9.0
      %vm345 = vcmp.lt.f32.partialorder %v325, 9.0
      %vm346 = vcmp.lt.f32.partialorder %v326, 9.0
      %vm347 = vmand %vm337, %vm342
      %vm348 = vmand %vm338, %vm343
      %vm349 = vmand %vm339, %vm344
      %vm350 = vmand %vm340, %vm345
      %vm351 = vmand %vm341, %vm346
      %vm352 = vcmp.ge.f32.partialorder %v332, 1.0
      %vm353 = vcmp.ge.f32.partialorder %v333, 1.0
      %vm354 = vcmp.ge.f32.partialorder %v334, 1.0
      %vm355 = vcmp.ge.f32.partialorder %v335, 1.0
      %vm356 = vcmp.ge.f32.partialorder %v336, 1.0
      %vm357 = vmand %vm347, %vm352
      %vm358 = vmand %vm348, %vm353
      %vm359 = vmand %vm349, %vm354
      %vm360 = vmand %vm350, %vm355
      %vm361 = vmand %vm351, %vm356
      %vm362 = vcmp.lt.f32.partialorder %v332, 3.0
      %vm363 = vcmp.lt.f32.partialorder %v333, 3.0
      %vm364 = vcmp.lt.f32.partialorder %v334, 3.0
      %vm365 = vcmp.lt.f32.partialorder %v335, 3.0
      %vm366 = vcmp.lt.f32.partialorder %v336, 3.0
      %vm367 = vmand %vm357, %vm362
      %vm368 = vmand %vm358, %vm363
      %vm369 = vmand %vm359, %vm364
      %vm370 = vmand %vm360, %vm365
      %vm371 = vmand %vm361, %vm366
      %v372 = vsel %vm367, 1, 0
      %v373 = vsel %vm368, 1, 0
      %v374 = vsel %vm369, 1, 0
      %v375 = vsel %vm370, 1, 0
      %v376 = vsel %vm371, 1, 0
      %v377 = vcvt.s32.f32 %v372
      %v378 = vcvt.s32.f32 %v373
      %v379 = vcvt.s32.f32 %v374
      %v380 = vcvt.s32.f32 %v375
      %v381 = vcvt.s32.f32 %v376
      %v382 = vld [vmem:[%s271] sm:$0xff]
      %v383 = vld [vmem:[%s271 + $0x8] sm:$0xff]
      %v384 = vld [vmem:[%s271 + $0x10] sm:$0xff]
      %v385 = vld [vmem:[%s271 + $0x18] sm:$0xff]
      %v386 = vld [vmem:[%s271 + $0x20] sm:$0xff]
      %v387 = vld [vmem:[%s275] sm:$0xf]
      %v388 = vld [vmem:[%s275 + $0x4] sm:$0xf]
      %v389 = vld [vmem:[%s275 + $0x8] sm:$0xf]
      %v390 = vld [vmem:[%s275 + $0xc] sm:$0xf]
      %v391 = vld [vmem:[%s275 + $0x10] sm:$0xf]
      %v392 = vld [vmem:[%s275 + $0x14] sm:$0xf]
      %v393 = vld [vmem:[%s275 + $0x18] sm:$0xf]
      %v394 = vld [vmem:[%s275 + $0x1c] sm:$0xf]
      %v395 = vld [vmem:[%s275 + $0x20] sm:$0xf]
      %v396 = vld [vmem:[%s275 + $0x24] sm:$0xf]
      %v397 = vld [vmem:[%s275 + $0x28] sm:$0xf]
      %v398 = vld [vmem:[%s275 + $0x2c] sm:$0xf]
      %v399 = vld [vmem:[%s275 + $0x30] sm:$0xf]
      %v400 = vld [vmem:[%s275 + $0x34] sm:$0xf]
      %v401 = vld [vmem:[%s275 + $0x38] sm:$0xf]
      %v402 = vld [vmem:[%s275 + $0x3c] sm:$0xf]
      %v403 = vld [vmem:[%s275 + $0x40] sm:$0xf]
      %v404 = vld [vmem:[%s275 + $0x44] sm:$0xf]
      %v405 = vld [vmem:[%s278] sm:$0x1]
      %v407 = vperm.slane %v405, 0
      %v414 = vunpack.c.l.b16 %v382
      %v415 = vunpack.c.h.b16 %v382
      %v416 = vunpack.c.l.b16 %v383
      %v417 = vunpack.c.h.b16 %v383
      %v418 = vunpack.c.l.b16 %v384
      %v419 = vunpack.c.h.b16 %v384
      %v420 = vunpack.c.l.b16 %v385
      %v421 = vunpack.c.h.b16 %v385
      %v422 = vunpack.c.l.b16 %v386
      %v423 = vunpack.c.h.b16 %v386
      %v424 = vpack.c.b16 %v416, %v414
      %v425 = vpack.c.b16 %v417, %v415
      %v426 = vpack.c.b16 %v420, %v418
      %v427 = vpack.c.b16 %v421, %v419
      %v428 = vpack.c.b16 %v422, %v422
      %v429 = vpack.c.b16 %v423, %v423
      %v451 = vunpack.c.l.b16 %v387
      %v452 = vunpack.c.l.b16 %v388
      %v453 = vunpack.c.l.b16 %v389
      %v454 = vunpack.c.l.b16 %v390
      %v455 = vunpack.c.l.b16 %v391
      %v456 = vunpack.c.l.b16 %v392
      %v457 = vunpack.c.l.b16 %v393
      %v458 = vunpack.c.l.b16 %v394
      %v459 = vunpack.c.l.b16 %v395
      %v460 = vunpack.c.l.b16 %v396
      %v461 = vunpack.c.l.b16 %v397
      %v462 = vunpack.c.l.b16 %v398
      %v463 = vunpack.c.l.b16 %v399
      %v464 = vunpack.c.l.b16 %v400
      %v465 = vunpack.c.l.b16 %v401
      %v466 = vunpack.c.l.b16 %v402
      %v467 = vunpack.c.l.b16 %v403
      %v468 = vunpack.c.l.b16 %v404
      %v469 = vpack.c.b16 %v452, %v451
      %v470 = vpack.c.b16 %v454, %v453
      %v471 = vpack.c.b16 %v456, %v455
      %v472 = vpack.c.b16 %v458, %v457
      %v473 = vpack.c.b16 %v460, %v459
      %v474 = vpack.c.b16 %v462, %v461
      %v475 = vpack.c.b16 %v464, %v463
      %v476 = vpack.c.b16 %v466, %v465
      %v477 = vpack.c.b16 %v468, %v467
      %vm487 = vcmask 130048
      %v489 = vsel %vm487, %v425, 0
      %v492 = vsel %vm487, %v427, 0
      %v495 = vsel %vm487, %v429, 0
      %497 = vmatpush.bf16.msra.mxu0 %v476
      %498 = vmatpush.bf16.msra.mxu0 %v475
      %499 = vmatpush.bf16.msra.mxu0 %v474
      %500 = vmatpush.bf16.msra.mxu0 %v473
      %501 = vmatpush.bf16.msra.mxu0 %v472
      %502 = vmatpush.bf16.msra.mxu0 %v471
      %503 = vmatpush.bf16.msra.mxu0 %v470
      %504 = vmatpush.bf16.msra.mxu0 %v469
      %505 = vmatmul.bf16.gmra.mxu0 %v424
      %v506 = vpop.f32.mrf.mxu0
      %v507 = vadd.f32 %v407, %v506
      %v508 = vpop.f32.mrf.mxu0
      %v509 = vadd.f32 %v407, %v508
      %510 = vmatmul.bf16.gmra.mxu0 %v426
      %v511 = vpop.f32.mrf.mxu0
      %v512 = vadd.f32 %v407, %v511
      %v513 = vpop.f32.mrf.mxu0
      %v514 = vadd.f32 %v407, %v513
      %515 = vmatmul.bf16.gmra.mxu0 %v428
      %v516 = vpop.f32.mrf.mxu0
      %v517 = vadd.f32 %v407, %v516
      %v518 = vpop.f32.mrf.mxu0
      %519 = vdwg.mxu0
      %520 = vmatpush.bf16.msra.mxu0 0
      %521 = vmatpush.bf16.msra.mxu0 0
      %522 = vmatpush.bf16.msra.mxu0 0
      %523 = vmatpush.bf16.msra.mxu0 0
      %524 = vmatpush.bf16.msra.mxu0 0
      %525 = vmatpush.bf16.msra.mxu0 0
      %526 = vmatpush.bf16.msra.mxu0 0
      %527 = vmatpush.bf16.msra.mxu0 %v477
      %528 = vmatmul.bf16.gmra.mxu0 %v489
      %v529 = vpop.f32.mrf.mxu0
      %v530 = vadd.f32 %v507, %v529
      %v531 = vpop.f32.mrf.mxu0
      %v532 = vadd.f32 %v509, %v531
      %533 = vmatmul.bf16.gmra.mxu0 %v492
      %v534 = vpop.f32.mrf.mxu0
      %v535 = vadd.f32 %v512, %v534
      %v536 = vpop.f32.mrf.mxu0
      %v537 = vadd.f32 %v514, %v536
      %538 = vmatmul.bf16.gmra.mxu0 %v495
      %v539 = vpop.f32.mrf.mxu0
      %v540 = vadd.f32 %v517, %v539
      %v541 = vpop.f32.mrf.mxu0
      %542 = vdwg.mxu0
      %v543 = vmul.f32 %v530, 0.5
      %v544 = vmul.f32 %v532, 0.5
      %v545 = vmul.f32 %v535, 0.5
      %v546 = vmul.f32 %v537, 0.5
      %v547 = vmul.f32 %v540, 0.5
      %v548 = vmul.f32 %v530, 0.70710677
      %v549 = vmul.f32 %v532, 0.70710677
      %v550 = vmul.f32 %v535, 0.70710677
      %v551 = vmul.f32 %v537, 0.70710677
      %v552 = vmul.f32 %v540, 0.70710677
      %v553 = vand.u32 2147483647, %v548
      %v554 = vand.u32 2147483647, %v549
      %v555 = vand.u32 2147483647, %v550
      %v556 = vand.u32 2147483647, %v551
      %v557 = vand.u32 2147483647, %v552
      %v558 = vmul.f32 %v553, 0.3275911
      %v559 = vmul.f32 %v554, 0.3275911
      %v560 = vmul.f32 %v555, 0.3275911
      %v561 = vmul.f32 %v556, 0.3275911
      %v562 = vmul.f32 %v557, 0.3275911
      %v563 = vadd.f32 %v558, 1.0
      %v564 = vadd.f32 %v559, 1.0
      %v565 = vadd.f32 %v560, 1.0
      %v566 = vadd.f32 %v561, 1.0
      %v567 = vadd.f32 %v562, 1.0
      %v568 = vrcp.pop %v563
      %v569 = vrcp.pop %v564
      %v570 = vrcp.pop %v565
      %v571 = vrcp.pop %v566
      %v572 = vrcp.pop %v567
      %v573 = vmul.f32 %v568, 1.0614054
      %v574 = vmul.f32 %v569, 1.0614054
      %v575 = vmul.f32 %v570, 1.0614054
      %v576 = vmul.f32 %v571, 1.0614054
      %v577 = vmul.f32 %v572, 1.0614054
      %v578 = vadd.f32 %v573, -1.4531521
      %v579 = vadd.f32 %v574, -1.4531521
      %v580 = vadd.f32 %v575, -1.4531521
      %v581 = vadd.f32 %v576, -1.4531521
      %v582 = vadd.f32 %v577, -1.4531521
      %v583 = vmul.f32 %v578, %v568
      %v584 = vmul.f32 %v579, %v569
      %v585 = vmul.f32 %v580, %v570
      %v586 = vmul.f32 %v581, %v571
      %v587 = vmul.f32 %v582, %v572
      %v588 = vadd.f32 %v583, 1.4214138
      %v589 = vadd.f32 %v584, 1.4214138
      %v590 = vadd.f32 %v585, 1.4214138
      %v591 = vadd.f32 %v586, 1.4214138
      %v592 = vadd.f32 %v587, 1.4214138
      %v593 = vmul.f32 %v588, %v568
      %v594 = vmul.f32 %v589, %v569
      %v595 = vmul.f32 %v590, %v570
      %v596 = vmul.f32 %v591, %v571
      %v597 = vmul.f32 %v592, %v572
      %v598 = vadd.f32 %v593, -0.28449672
      %v599 = vadd.f32 %v594, -0.28449672
      %v600 = vadd.f32 %v595, -0.28449672
      %v601 = vadd.f32 %v596, -0.28449672
      %v602 = vadd.f32 %v597, -0.28449672
      %v603 = vmul.f32 %v598, %v568
      %v604 = vmul.f32 %v599, %v569
      %v605 = vmul.f32 %v600, %v570
      %v606 = vmul.f32 %v601, %v571
      %v607 = vmul.f32 %v602, %v572
      %v608 = vadd.f32 %v603, 0.2548296
      %v609 = vadd.f32 %v604, 0.2548296
      %v610 = vadd.f32 %v605, 0.2548296
      %v611 = vadd.f32 %v606, 0.2548296
      %v612 = vadd.f32 %v607, 0.2548296
      %v613 = vmul.f32 %v608, %v568
      %v614 = vmul.f32 %v609, %v569
      %v615 = vmul.f32 %v610, %v570
      %v616 = vmul.f32 %v611, %v571
      %v617 = vmul.f32 %v612, %v572
      %v618 = vsub.f32 0.0, %v553
      %v619 = vsub.f32 0.0, %v554
      %v620 = vsub.f32 0.0, %v555
      %v621 = vsub.f32 0.0, %v556
      %v622 = vsub.f32 0.0, %v557
      %v623 = vmul.f32 %v618, %v553
      %v624 = vmul.f32 %v619, %v554
      %v625 = vmul.f32 %v620, %v555
      %v626 = vmul.f32 %v621, %v556
      %v627 = vmul.f32 %v622, %v557
      %v628 = vmul.f32 %v623, 1.442695
      %v629 = vpow.pop %v628
      %v630 = vmul.f32 %v624, 1.442695
      %v631 = vpow.pop %v630
      %v632 = vmul.f32 %v625, 1.442695
      %v633 = vpow.pop %v632
      %v634 = vmul.f32 %v626, 1.442695
      %v635 = vpow.pop %v634
      %v636 = vmul.f32 %v627, 1.442695
      %v637 = vpow.pop %v636
      %v638 = vmul.f32 %v613, %v629
      %v639 = vmul.f32 %v614, %v631
      %v640 = vmul.f32 %v615, %v633
      %v641 = vmul.f32 %v616, %v635
      %v642 = vmul.f32 %v617, %v637
      %v643 = vsub.f32 1.0, %v638
      %v644 = vsub.f32 1.0, %v639
      %v645 = vsub.f32 1.0, %v640
      %v646 = vsub.f32 1.0, %v641
      %v647 = vsub.f32 1.0, %v642
      %vm648 = vcmp.ge.f32.partialorder %v548, 0.0
      %vm649 = vcmp.ge.f32.partialorder %v549, 0.0
      %vm650 = vcmp.ge.f32.partialorder %v550, 0.0
      %vm651 = vcmp.ge.f32.partialorder %v551, 0.0
      %vm652 = vcmp.ge.f32.partialorder %v552, 0.0
      %v653 = vsub.f32 0.0, %v643
      %v654 = vsub.f32 0.0, %v644
      %v655 = vsub.f32 0.0, %v645
      %v656 = vsub.f32 0.0, %v646
      %v657 = vsub.f32 0.0, %v647
      %v658 = vsel %vm648, %v643, %v653
      %v659 = vsel %vm649, %v644, %v654
      %v660 = vsel %vm650, %v645, %v655
      %v661 = vsel %vm651, %v646, %v656
      %v662 = vsel %vm652, %v647, %v657
      %v663 = vadd.f32 %v658, 1.0
      %v664 = vadd.f32 %v659, 1.0
      %v665 = vadd.f32 %v660, 1.0
      %v666 = vadd.f32 %v661, 1.0
      %v667 = vadd.f32 %v662, 1.0
      %v668 = vmul.f32 %v543, %v663
      %v669 = vmul.f32 %v544, %v664
      %v670 = vmul.f32 %v545, %v665
      %v671 = vmul.f32 %v546, %v666
      %v672 = vmul.f32 %v547, %v667
      %v673 = vmul.f32 %v668, %v377
      %v674 = vmul.f32 %v669, %v378
      %v675 = vmul.f32 %v670, %v379
      %v676 = vmul.f32 %v671, %v380
      %v677 = vmul.f32 %v672, %v381
      %v678 = vpack.c.bf16 %v674, %v673
      %v679 = vpack.c.bf16 %v676, %v675
      %v680 = vpack.c.bf16 %v677, %v677
      %v681 = vld [vmem:[%s283] sm:$0xf]
      %v682 = vld [vmem:[%s283 + $0x4] sm:$0xf]
      %v683 = vld [vmem:[%s283 + $0x8] sm:$0xf]
      %v684 = vld [vmem:[%s283 + $0xc] sm:$0xf]
      %v689 = vunpack.c.l.b16 %v681
      %v690 = vunpack.c.l.b16 %v682
      %v691 = vunpack.c.l.b16 %v683
      %v692 = vunpack.c.l.b16 %v684
      %v693 = vpack.c.b16 %v690, %v689
      %v694 = vpack.c.b16 %v692, %v691
      %vm697 = vcmask 261120
      %v699 = vsel %vm697, %v678, 0
      %v702 = vsel %vm697, %v679, 0
      %v705 = vsel %vm697, %v680, 0
      %707 = vmatpush.bf16.msra.mxu0 0
      %708 = vmatpush.bf16.msra.mxu0 0
      %709 = vmatpush.bf16.msra.mxu0 0
      %710 = vmatpush.bf16.msra.mxu0 0
      %711 = vmatpush.bf16.msra.mxu0 0
      %712 = vmatpush.bf16.msra.mxu0 0
      %713 = vmatpush.bf16.msra.mxu0 %v694
      %714 = vmatpush.bf16.msra.mxu0 %v693
      %715 = vmatmul.bf16.gmra.mxu0 %v699
      %v716 = vpop.f32.mrf.mxu0
      %v717 = vadd.f32 0.0, %v716
      %v718 = vpop.f32.mrf.mxu0
      %v719 = vadd.f32 0.0, %v718
      %720 = vmatmul.bf16.gmra.mxu0 %v702
      %v721 = vpop.f32.mrf.mxu0
      %v722 = vadd.f32 0.0, %v721
      %v723 = vpop.f32.mrf.mxu0
      %v724 = vadd.f32 0.0, %v723
      %725 = vmatmul.bf16.gmra.mxu0 %v705
      %v726 = vpop.f32.mrf.mxu0
      %v727 = vadd.f32 0.0, %v726
      %v728 = vpop.f32.mrf.mxu0
      %729 = vdwg.mxu0
      %v731 = vrot.slane %v727, 3
      %vm737 = vcmask 1044480
      %v738 = vrot.slane %v717, 3
      %v739 = vrot.slane %v719, 3
      %v740 = vsel %vm737, %v738, %v739
      %v741 = vrot.slane %v722, 3
      %v742 = vsel %vm737, %v739, %v741
      %v743 = vrot.slane %v724, 3
      %v744 = vsel %vm737, %v741, %v743
      %v745 = vsel %vm737, %v743, %v731
      %v751 = vsel %vm737, %v731, %v738
      %v752 = vadd.f32 %v751, 0.0
      %v753 = vadd.f32 %v740, 0.0
      %v754 = vadd.f32 %v742, 0.0
      %v755 = vadd.f32 %v744, 0.0
      %v756 = vadd.f32 %v745, 0.0
      %s757 = scalar_lea.vmem %s283, 16
      %v758 = vld [vmem:[%s757] sm:$0xf]
      %v759 = vld [vmem:[%s757 + $0x4] sm:$0xf]
      %v760 = vld [vmem:[%s757 + $0x8] sm:$0xf]
      %v761 = vld [vmem:[%s757 + $0xc] sm:$0xf]
      %v766 = vunpack.c.l.b16 %v758
      %v767 = vunpack.c.l.b16 %v759
      %v768 = vunpack.c.l.b16 %v760
      %v769 = vunpack.c.l.b16 %v761
      %v770 = vpack.c.b16 %v767, %v766
      %v771 = vpack.c.b16 %v769, %v768
      %774 = vmatpush.bf16.msra.mxu0 0
      %775 = vmatpush.bf16.msra.mxu0 0
      %776 = vmatpush.bf16.msra.mxu0 0
      %777 = vmatpush.bf16.msra.mxu0 0
      %778 = vmatpush.bf16.msra.mxu0 0
      %779 = vmatpush.bf16.msra.mxu0 0
      %780 = vmatpush.bf16.msra.mxu0 %v771
      %781 = vmatpush.bf16.msra.mxu0 %v770
      %782 = vmatmul.bf16.gmra.mxu0 %v699
      %v783 = vpop.f32.mrf.mxu0
      %v784 = vadd.f32 0.0, %v783
      %v785 = vpop.f32.mrf.mxu0
      %v786 = vadd.f32 0.0, %v785
      %787 = vmatmul.bf16.gmra.mxu0 %v702
      %v788 = vpop.f32.mrf.mxu0
      %v789 = vadd.f32 0.0, %v788
      %v790 = vpop.f32.mrf.mxu0
      %v791 = vadd.f32 0.0, %v790
      %792 = vmatmul.bf16.gmra.mxu0 %v705
      %v793 = vpop.f32.mrf.mxu0
      %v794 = vadd.f32 0.0, %v793
      %v795 = vpop.f32.mrf.mxu0
      %796 = vdwg.mxu0
      %v798 = vrot.slane %v794, 4
      %vm804 = vcmask 1043456
      %v805 = vrot.slane %v784, 4
      %v806 = vrot.slane %v786, 4
      %v807 = vsel %vm804, %v805, %v806
      %v808 = vrot.slane %v789, 4
      %v809 = vsel %vm804, %v806, %v808
      %v810 = vrot.slane %v791, 4
      %v811 = vsel %vm804, %v808, %v810
      %v812 = vsel %vm804, %v810, %v798
      %v818 = vsel %vm804, %v798, %v805
      %v819 = vadd.f32 %v752, %v818
      %v820 = vadd.f32 %v753, %v807
      %v821 = vadd.f32 %v754, %v809
      %v822 = vadd.f32 %v755, %v811
      %v823 = vadd.f32 %v756, %v812
      %s824 = scalar_lea.vmem %s283, 32
      %v825 = vld [vmem:[%s824] sm:$0xf]
      %v826 = vld [vmem:[%s824 + $0x4] sm:$0xf]
      %v827 = vld [vmem:[%s824 + $0x8] sm:$0xf]
      %v828 = vld [vmem:[%s824 + $0xc] sm:$0xf]
      %v833 = vunpack.c.l.b16 %v825
      %v834 = vunpack.c.l.b16 %v826
      %v835 = vunpack.c.l.b16 %v827
      %v836 = vunpack.c.l.b16 %v828
      %v837 = vpack.c.b16 %v834, %v833
      %v838 = vpack.c.b16 %v836, %v835
      %841 = vmatpush.bf16.msra.mxu0 0
      %842 = vmatpush.bf16.msra.mxu0 0
      %843 = vmatpush.bf16.msra.mxu0 0
      %844 = vmatpush.bf16.msra.mxu0 0
      %845 = vmatpush.bf16.msra.mxu0 0
      %846 = vmatpush.bf16.msra.mxu0 0
      %847 = vmatpush.bf16.msra.mxu0 %v838
      %848 = vmatpush.bf16.msra.mxu0 %v837
      %849 = vmatmul.bf16.gmra.mxu0 %v699
      %v850 = vpop.f32.mrf.mxu0
      %v851 = vadd.f32 0.0, %v850
      %v852 = vpop.f32.mrf.mxu0
      %v853 = vadd.f32 0.0, %v852
      %854 = vmatmul.bf16.gmra.mxu0 %v702
      %v855 = vpop.f32.mrf.mxu0
      %v856 = vadd.f32 0.0, %v855
      %v857 = vpop.f32.mrf.mxu0
      %v858 = vadd.f32 0.0, %v857
      %859 = vmatmul.bf16.gmra.mxu0 %v705
      %v860 = vpop.f32.mrf.mxu0
      %v861 = vadd.f32 0.0, %v860
      %v862 = vpop.f32.mrf.mxu0
      %863 = vdwg.mxu0
      %v865 = vrot.slane %v861, 5
      %vm871 = vcmask 1042432
      %v872 = vrot.slane %v851, 5
      %v873 = vrot.slane %v853, 5
      %v874 = vsel %vm871, %v872, %v873
      %v875 = vrot.slane %v856, 5
      %v876 = vsel %vm871, %v873, %v875
      %v877 = vrot.slane %v858, 5
      %v878 = vsel %vm871, %v875, %v877
      %v879 = vsel %vm871, %v877, %v865
      %v885 = vsel %vm871, %v865, %v872
      %v886 = vadd.f32 %v819, %v885
      %v887 = vadd.f32 %v820, %v874
      %v888 = vadd.f32 %v821, %v876
      %v889 = vadd.f32 %v822, %v878
      %v890 = vadd.f32 %v823, %v879
      %s891 = scalar_lea.vmem %s283, 48
      %v892 = vld [vmem:[%s891] sm:$0xf]
      %v893 = vld [vmem:[%s891 + $0x4] sm:$0xf]
      %v894 = vld [vmem:[%s891 + $0x8] sm:$0xf]
      %v895 = vld [vmem:[%s891 + $0xc] sm:$0xf]
      %v900 = vunpack.c.l.b16 %v892
      %v901 = vunpack.c.l.b16 %v893
      %v902 = vunpack.c.l.b16 %v894
      %v903 = vunpack.c.l.b16 %v895
      %v904 = vpack.c.b16 %v901, %v900
      %v905 = vpack.c.b16 %v903, %v902
      %908 = vmatpush.bf16.msra.mxu0 0
      %909 = vmatpush.bf16.msra.mxu0 0
      %910 = vmatpush.bf16.msra.mxu0 0
      %911 = vmatpush.bf16.msra.mxu0 0
      %912 = vmatpush.bf16.msra.mxu0 0
      %913 = vmatpush.bf16.msra.mxu0 0
      %914 = vmatpush.bf16.msra.mxu0 %v905
      %915 = vmatpush.bf16.msra.mxu0 %v904
      %916 = vmatmul.bf16.gmra.mxu0 %v699
      %v917 = vpop.f32.mrf.mxu0
      %v918 = vadd.f32 0.0, %v917
      %v919 = vpop.f32.mrf.mxu0
      %v920 = vadd.f32 0.0, %v919
      %921 = vmatmul.bf16.gmra.mxu0 %v702
      %v922 = vpop.f32.mrf.mxu0
      %v923 = vadd.f32 0.0, %v922
      %v924 = vpop.f32.mrf.mxu0
      %v925 = vadd.f32 0.0, %v924
      %926 = vmatmul.bf16.gmra.mxu0 %v705
      %v927 = vpop.f32.mrf.mxu0
      %v928 = vadd.f32 0.0, %v927
      %v929 = vpop.f32.mrf.mxu0
      %930 = vdwg.mxu0
      %v932 = vrot.slane %v928, 7
      %vm938 = vcmask 1040384
      %v939 = vrot.slane %v918, 7
      %v940 = vrot.slane %v920, 7
      %v941 = vsel %vm938, %v939, %v940
      %v942 = vrot.slane %v923, 7
      %v943 = vsel %vm938, %v940, %v942
      %v944 = vrot.slane %v925, 7
      %v945 = vsel %vm938, %v942, %v944
      %v946 = vsel %vm938, %v944, %v932
      %v952 = vsel %vm938, %v932, %v939
      %v953 = vadd.f32 %v886, %v952
      %v954 = vadd.f32 %v887, %v941
      %v955 = vadd.f32 %v888, %v943
      %v956 = vadd.f32 %v889, %v945
      %v957 = vadd.f32 %v890, %v946
      %s958 = scalar_lea.vmem %s283, 64
      %v959 = vld [vmem:[%s958] sm:$0xf]
      %v960 = vld [vmem:[%s958 + $0x4] sm:$0xf]
      %v961 = vld [vmem:[%s958 + $0x8] sm:$0xf]
      %v962 = vld [vmem:[%s958 + $0xc] sm:$0xf]
      %v967 = vunpack.c.l.b16 %v959
      %v968 = vunpack.c.l.b16 %v960
      %v969 = vunpack.c.l.b16 %v961
      %v970 = vunpack.c.l.b16 %v962
      %v971 = vpack.c.b16 %v968, %v967
      %v972 = vpack.c.b16 %v970, %v969
      %975 = vmatpush.bf16.msra.mxu0 0
      %976 = vmatpush.bf16.msra.mxu0 0
      %977 = vmatpush.bf16.msra.mxu0 0
      %978 = vmatpush.bf16.msra.mxu0 0
      %979 = vmatpush.bf16.msra.mxu0 0
      %980 = vmatpush.bf16.msra.mxu0 0
      %981 = vmatpush.bf16.msra.mxu0 %v972
      %982 = vmatpush.bf16.msra.mxu0 %v971
      %983 = vmatmul.bf16.gmra.mxu0 %v699
      %v984 = vpop.f32.mrf.mxu0
      %v985 = vadd.f32 0.0, %v984
      %v986 = vpop.f32.mrf.mxu0
      %v987 = vadd.f32 0.0, %v986
      %988 = vmatmul.bf16.gmra.mxu0 %v702
      %v989 = vpop.f32.mrf.mxu0
      %v990 = vadd.f32 0.0, %v989
      %v991 = vpop.f32.mrf.mxu0
      %v992 = vadd.f32 0.0, %v991
      %993 = vmatmul.bf16.gmra.mxu0 %v705
      %v994 = vpop.f32.mrf.mxu0
      %v995 = vadd.f32 0.0, %v994
      %v996 = vpop.f32.mrf.mxu0
      %997 = vdwg.mxu0
      %v998 = vadd.f32 %v953, %v985
      %v999 = vadd.f32 %v954, %v987
      %v1000 = vadd.f32 %v955, %v990
      %v1001 = vadd.f32 %v956, %v992
      %v1002 = vadd.f32 %v957, %v995
      %s1003 = scalar_lea.vmem %s283, 80
      %v1004 = vld [vmem:[%s1003] sm:$0xf]
      %v1005 = vld [vmem:[%s1003 + $0x4] sm:$0xf]
      %v1006 = vld [vmem:[%s1003 + $0x8] sm:$0xf]
      %v1007 = vld [vmem:[%s1003 + $0xc] sm:$0xf]
      %v1012 = vunpack.c.l.b16 %v1004
      %v1013 = vunpack.c.l.b16 %v1005
      %v1014 = vunpack.c.l.b16 %v1006
      %v1015 = vunpack.c.l.b16 %v1007
      %v1016 = vpack.c.b16 %v1013, %v1012
      %v1017 = vpack.c.b16 %v1015, %v1014
      %1020 = vmatpush.bf16.msra.mxu0 0
      %1021 = vmatpush.bf16.msra.mxu0 0
      %1022 = vmatpush.bf16.msra.mxu0 0
      %1023 = vmatpush.bf16.msra.mxu0 0
      %1024 = vmatpush.bf16.msra.mxu0 0
      %1025 = vmatpush.bf16.msra.mxu0 0
      %1026 = vmatpush.bf16.msra.mxu0 %v1017
      %1027 = vmatpush.bf16.msra.mxu0 %v1016
      %1028 = vmatmul.bf16.gmra.mxu0 %v699
      %v1029 = vpop.f32.mrf.mxu0
      %v1030 = vadd.f32 0.0, %v1029
      %v1031 = vpop.f32.mrf.mxu0
      %v1032 = vadd.f32 0.0, %v1031
      %1033 = vmatmul.bf16.gmra.mxu0 %v702
      %v1034 = vpop.f32.mrf.mxu0
      %v1035 = vadd.f32 0.0, %v1034
      %v1036 = vpop.f32.mrf.mxu0
      %v1037 = vadd.f32 0.0, %v1036
      %1038 = vmatmul.bf16.gmra.mxu0 %v705
      %v1039 = vpop.f32.mrf.mxu0
      %v1040 = vadd.f32 0.0, %v1039
      %v1041 = vpop.f32.mrf.mxu0
      %1042 = vdwg.mxu0
      %vm1048 = vcmask 1046528
      %v1049 = vrot.slane %v1030, 1
      %v1050 = vrot.slane %v1032, 1
      %v1051 = vsel %vm1048, %v1049, %v1050
      %v1052 = vrot.slane %v1035, 1
      %v1053 = vsel %vm1048, %v1050, %v1052
      %v1054 = vrot.slane %v1037, 1
      %v1055 = vsel %vm1048, %v1052, %v1054
      %v1056 = vrot.slane %v1040, 1
      %v1057 = vsel %vm1048, %v1054, %v1056
      %v1064 = vsel %vm1048, %v1056, %v1049
      %v1065 = vadd.f32 %v998, %v1051
      %v1066 = vadd.f32 %v999, %v1053
      %v1067 = vadd.f32 %v1000, %v1055
      %v1068 = vadd.f32 %v1001, %v1057
      %v1069 = vadd.f32 %v1002, %v1064
      %s1070 = scalar_lea.vmem %s283, 96
      %v1071 = vld [vmem:[%s1070] sm:$0xf]
      %v1072 = vld [vmem:[%s1070 + $0x4] sm:$0xf]
      %v1073 = vld [vmem:[%s1070 + $0x8] sm:$0xf]
      %v1074 = vld [vmem:[%s1070 + $0xc] sm:$0xf]
      %v1079 = vunpack.c.l.b16 %v1071
      %v1080 = vunpack.c.l.b16 %v1072
      %v1081 = vunpack.c.l.b16 %v1073
      %v1082 = vunpack.c.l.b16 %v1074
      %v1083 = vpack.c.b16 %v1080, %v1079
      %v1084 = vpack.c.b16 %v1082, %v1081
      %1087 = vmatpush.bf16.msra.mxu0 0
      %1088 = vmatpush.bf16.msra.mxu0 0
      %1089 = vmatpush.bf16.msra.mxu0 0
      %1090 = vmatpush.bf16.msra.mxu0 0
      %1091 = vmatpush.bf16.msra.mxu0 0
      %1092 = vmatpush.bf16.msra.mxu0 0
      %1093 = vmatpush.bf16.msra.mxu0 %v1084
      %1094 = vmatpush.bf16.msra.mxu0 %v1083
      %1095 = vmatmul.bf16.gmra.mxu0 %v699
      %v1096 = vpop.f32.mrf.mxu0
      %v1097 = vadd.f32 0.0, %v1096
      %v1098 = vpop.f32.mrf.mxu0
      %v1099 = vadd.f32 0.0, %v1098
      %1100 = vmatmul.bf16.gmra.mxu0 %v702
      %v1101 = vpop.f32.mrf.mxu0
      %v1102 = vadd.f32 0.0, %v1101
      %v1103 = vpop.f32.mrf.mxu0
      %v1104 = vadd.f32 0.0, %v1103
      %1105 = vmatmul.bf16.gmra.mxu0 %v705
      %v1106 = vpop.f32.mrf.mxu0
      %v1107 = vadd.f32 0.0, %v1106
      %v1108 = vpop.f32.mrf.mxu0
      %1109 = vdwg.mxu0
      %v1115 = vrot.slane %v1097, 3
      %v1116 = vrot.slane %v1099, 3
      %v1117 = vsel %vm737, %v1115, %v1116
      %v1118 = vrot.slane %v1102, 3
      %v1119 = vsel %vm737, %v1116, %v1118
      %v1120 = vrot.slane %v1104, 3
      %v1121 = vsel %vm737, %v1118, %v1120
      %v1122 = vrot.slane %v1107, 3
      %v1123 = vsel %vm737, %v1120, %v1122
      %v1130 = vsel %vm737, %v1122, %v1115
      %v1131 = vadd.f32 %v1065, %v1117
      %v1132 = vadd.f32 %v1066, %v1119
      %v1133 = vadd.f32 %v1067, %v1121
      %v1134 = vadd.f32 %v1068, %v1123
      %v1135 = vadd.f32 %v1069, %v1130
      %s1136 = scalar_lea.vmem %s283, 112
      %v1137 = vld [vmem:[%s1136] sm:$0xf]
      %v1138 = vld [vmem:[%s1136 + $0x4] sm:$0xf]
      %v1139 = vld [vmem:[%s1136 + $0x8] sm:$0xf]
      %v1140 = vld [vmem:[%s1136 + $0xc] sm:$0xf]
      %v1145 = vunpack.c.l.b16 %v1137
      %v1146 = vunpack.c.l.b16 %v1138
      %v1147 = vunpack.c.l.b16 %v1139
      %v1148 = vunpack.c.l.b16 %v1140
      %v1149 = vpack.c.b16 %v1146, %v1145
      %v1150 = vpack.c.b16 %v1148, %v1147
      %1153 = vmatpush.bf16.msra.mxu0 0
      %1154 = vmatpush.bf16.msra.mxu0 0
      %1155 = vmatpush.bf16.msra.mxu0 0
      %1156 = vmatpush.bf16.msra.mxu0 0
      %1157 = vmatpush.bf16.msra.mxu0 0
      %1158 = vmatpush.bf16.msra.mxu0 0
      %1159 = vmatpush.bf16.msra.mxu0 %v1150
      %1160 = vmatpush.bf16.msra.mxu0 %v1149
      %1161 = vmatmul.bf16.gmra.mxu0 %v699
      %v1162 = vpop.f32.mrf.mxu0
      %v1163 = vadd.f32 0.0, %v1162
      %v1164 = vpop.f32.mrf.mxu0
      %v1165 = vadd.f32 0.0, %v1164
      %1166 = vmatmul.bf16.gmra.mxu0 %v702
      %v1167 = vpop.f32.mrf.mxu0
      %v1168 = vadd.f32 0.0, %v1167
      %v1169 = vpop.f32.mrf.mxu0
      %v1170 = vadd.f32 0.0, %v1169
      %1171 = vmatmul.bf16.gmra.mxu0 %v705
      %v1172 = vpop.f32.mrf.mxu0
      %v1173 = vadd.f32 0.0, %v1172
      %v1174 = vpop.f32.mrf.mxu0
      %1175 = vdwg.mxu0
      %v1181 = vrot.slane %v1163, 4
      %v1182 = vrot.slane %v1165, 4
      %v1183 = vsel %vm804, %v1181, %v1182
      %v1184 = vrot.slane %v1168, 4
      %v1185 = vsel %vm804, %v1182, %v1184
      %v1186 = vrot.slane %v1170, 4
      %v1187 = vsel %vm804, %v1184, %v1186
      %v1188 = vrot.slane %v1173, 4
      %v1189 = vsel %vm804, %v1186, %v1188
      %v1196 = vsel %vm804, %v1188, %v1181
      %v1197 = vadd.f32 %v1131, %v1183
      %v1198 = vadd.f32 %v1132, %v1185
      %v1199 = vadd.f32 %v1133, %v1187
      %v1200 = vadd.f32 %v1134, %v1189
      %v1201 = vadd.f32 %v1135, %v1196
      %s1202 = scalar_lea.vmem %s283, 128
      %v1203 = vld [vmem:[%s1202] sm:$0xf]
      %v1204 = vld [vmem:[%s1202 + $0x4] sm:$0xf]
      %v1205 = vld [vmem:[%s1202 + $0x8] sm:$0xf]
      %v1206 = vld [vmem:[%s1202 + $0xc] sm:$0xf]
      %v1211 = vunpack.c.l.b16 %v1203
      %v1212 = vunpack.c.l.b16 %v1204
      %v1213 = vunpack.c.l.b16 %v1205
      %v1214 = vunpack.c.l.b16 %v1206
      %v1215 = vpack.c.b16 %v1212, %v1211
      %v1216 = vpack.c.b16 %v1214, %v1213
      %1219 = vmatpush.bf16.msra.mxu0 0
      %1220 = vmatpush.bf16.msra.mxu0 0
      %1221 = vmatpush.bf16.msra.mxu0 0
      %1222 = vmatpush.bf16.msra.mxu0 0
      %1223 = vmatpush.bf16.msra.mxu0 0
      %1224 = vmatpush.bf16.msra.mxu0 0
      %1225 = vmatpush.bf16.msra.mxu0 %v1216
      %1226 = vmatpush.bf16.msra.mxu0 %v1215
      %1227 = vmatmul.bf16.gmra.mxu0 %v699
      %v1228 = vpop.f32.mrf.mxu0
      %v1229 = vadd.f32 0.0, %v1228
      %v1230 = vpop.f32.mrf.mxu0
      %v1231 = vadd.f32 0.0, %v1230
      %1232 = vmatmul.bf16.gmra.mxu0 %v702
      %v1233 = vpop.f32.mrf.mxu0
      %v1234 = vadd.f32 0.0, %v1233
      %v1235 = vpop.f32.mrf.mxu0
      %v1236 = vadd.f32 0.0, %v1235
      %1237 = vmatmul.bf16.gmra.mxu0 %v705
      %v1238 = vpop.f32.mrf.mxu0
      %v1239 = vadd.f32 0.0, %v1238
      %v1240 = vpop.f32.mrf.mxu0
      %1241 = vdwg.mxu0
      %v1247 = vrot.slane %v1229, 5
      %v1248 = vrot.slane %v1231, 5
      %v1249 = vsel %vm871, %v1247, %v1248
      %v1250 = vrot.slane %v1234, 5
      %v1251 = vsel %vm871, %v1248, %v1250
      %v1252 = vrot.slane %v1236, 5
      %v1253 = vsel %vm871, %v1250, %v1252
      %v1254 = vrot.slane %v1239, 5
      %v1255 = vsel %vm871, %v1252, %v1254
      %v1262 = vsel %vm871, %v1254, %v1247
      %v1263 = vadd.f32 %v1197, %v1249
      %v1264 = vadd.f32 %v1198, %v1251
      %v1265 = vadd.f32 %v1199, %v1253
      %v1266 = vadd.f32 %v1200, %v1255
      %v1267 = vadd.f32 %v1201, %v1262
      %v1268 = vld [vmem:[#allocation2] sm:$0xff]
      %v1269 = vld [vmem:[#allocation2 + $0x8] sm:$0xff]
      %v1270 = vld [vmem:[#allocation2 + $0x10] sm:$0xff]
      %v1271 = vld [vmem:[#allocation2 + $0x18] sm:$0xff]
      %v1272 = vld [vmem:[#allocation2 + $0x20] sm:$0xff]
      %v1273 = vadd.f32 %v1268, %v1263
      %v1274 = vadd.f32 %v1269, %v1264
      %v1275 = vadd.f32 %v1270, %v1265
      %v1276 = vadd.f32 %v1271, %v1266
      %v1277 = vadd.f32 %v1272, %v1267
      %1278 = vst.msk [vmem:[#allocation2] sm:$0xff] %vm487, %v1273
      %1279 = vst.msk [vmem:[#allocation2 + $0x8] sm:$0xff] %vm487, %v1274
      %1280 = vst.msk [vmem:[#allocation2 + $0x10] sm:$0xff] %vm487, %v1275
      %1281 = vst.msk [vmem:[#allocation2 + $0x18] sm:$0xff] %vm487, %v1276
      %1282 = vst.msk [vmem:[#allocation2 + $0x20] sm:$0xff] %vm487, %v1277
      // Predicated region
      $region45: #{tpu_custom_call.1} parent=39 // pred_check
        %p1283 = pneg %p291
      $region46: #{tpu_custom_call.1} parent=39 // pred_check_branch
        %1285 = sbr.rel (%p1283) target = $region48
      $region47: #{tpu_custom_call.1} parent=39 // pred_region
        %v1286 = vld [vmem:[#allocation2] sm:$0xff]
        %v1287 = vld [vmem:[#allocation2 + $0x8] sm:$0xff]
        %v1288 = vld [vmem:[#allocation2 + $0x10] sm:$0xff]
        %v1289 = vld [vmem:[#allocation2 + $0x18] sm:$0xff]
        %v1290 = vld [vmem:[#allocation2 + $0x20] sm:$0xff]
        %v1291 = vld [vmem:[%s4] sm:$0x1]
        %v1293 = vperm.slane %v1291, 0
        %v1295 = vadd.f32 %v1286, %v1293
        %v1296 = vadd.f32 %v1287, %v1293
        %v1297 = vadd.f32 %v1288, %v1293
        %v1298 = vadd.f32 %v1289, %v1293
        %v1299 = vadd.f32 %v1290, %v1293
        %1300 = vst.msk [vmem:[%s289] sm:$0xff] %vm487, %v1295
        %1301 = vst.msk [vmem:[%s289 + $0x8] sm:$0xff] %vm487, %v1296
        %1302 = vst.msk [vmem:[%s289 + $0x10] sm:$0xff] %vm487, %v1297
        %1303 = vst.msk [vmem:[%s289 + $0x18] sm:$0xff] %vm487, %v1298
        %1304 = vst.msk [vmem:[%s289 + $0x20] sm:$0xff] %vm487, %v1299
      $region48: #{tpu_custom_call.1} parent=39 // pred_fallthru
        _
      %p1305 = scmp.lt.s32.totalorder %s20, 1
      %s1306 = scalar_select %p1305, %s20, 1
      %s1307 = smul.addr %s1306, 5
      %s1308 = smul.addr %s1307, 8
      %s1309 = scalar_lea.vmem %s5, %s1308
      // Predicated region
      $region49: #{tpu_custom_call.1} parent=39 // pred_check
        %p1310 = pneg %p171
      $region50: #{tpu_custom_call.1} parent=39 // pred_check_branch
        %1312 = sbr.rel (%p1310) target = $region52
      $region51: #{tpu_custom_call.1} parent=39 // pred_region
        _
      $region52: #{tpu_custom_call.1} parent=39 // pred_fallthru
        _
    $region40: #{tpu_custom_call.1} parent=5 // pred_fallthru
      _
    %p1313 = scmp.le.s32.totalorder 2, %s11
    // Predicated region
    $region53: #{tpu_custom_call.1} parent=5 // pred_check
      %p1314 = pneg %p1313
    $region54: #{tpu_custom_call.1} parent=5 // pred_check_branch
      %1316 = sbr.rel (%p1314) target = $region56
    $region55: #{tpu_custom_call.1} parent=5 // pred_region
      %s1317 = ssub.s32 %s11, 2
      // Predicated region
      $region57: #{tpu_custom_call.1} parent=55 // pred_check
        %p1318 = pneg %p177
      $region58: #{tpu_custom_call.1} parent=55 // pred_check_branch
        %1320 = sbr.rel (%p1318) target = $region60
      $region59: #{tpu_custom_call.1} parent=55 // pred_region
        %p1321 = scmp.lt.s32.totalorder %s22, 1
        %s1322 = scalar_select %p1321, %s22, 1
        %s1323 = smul.addr %s1322, 5
        %s1324 = smul.addr %s1323, 8
        %s1325 = scalar_lea.vmem %s5, %s1324
      $region60: #{tpu_custom_call.1} parent=55 // pred_fallthru
        _
    $region56: #{tpu_custom_call.1} parent=5 // pred_fallthru
      _
  $region6: #{tpu_custom_call.1} parent=0 // loop_footer
    %s15 = sadd.s32 1, %s11
  $region7: #{tpu_custom_call.1} parent=0 // loop_footer_branch
    %10 = sbr.rel target = $region3
  $region8: #{tpu_custom_call.1} parent=0 // loop_exit
    _

</llo_original>
